<compile_context>
chip_gen: v7x
topology: tpu7x:2x2x1
jax: 0.10.0
libtpu: 0.0.40
codegen_flags: <defaults>
</compile_context>

<pallas_src>
import functools

import numpy as np
import jax
import jax.numpy as jnp
from jax.experimental import pallas as pl
from jax.experimental.pallas import tpu as pltpu


_VMEM_BUDGET = 44 * 1024 * 1024        # per-step working-set target (v7x-safe)
_VMEM_LIMIT_CAP = 64 * 1024 * 1024     # scoped-VMEM limit cap


def _round_up(x, m):
    return ((x + m - 1) // m) * m


# ---------------------------------------------------------------------------
# Weight construction (mirrors STFT.__init__: periodic hann window * DFT basis)
# ---------------------------------------------------------------------------
def make_stft_weights(n_fft, win_length):
    """Returns (w_real, w_imag), each (n_fft, F) float32 numpy arrays."""
    F = n_fft // 2 + 1
    n = np.arange(win_length)
    fft_window = 0.5 - 0.5 * np.cos(2.0 * np.pi * n / win_length)  # periodic hann
    lpad = (n_fft - win_length) // 2                               # pad_center
    fft_window = np.pad(fft_window, (lpad, n_fft - win_length - lpad))
    k = np.arange(n_fft)[:, None]
    f = np.arange(F)[None, :]
    angle = 2.0 * np.pi * (k * f) / n_fft
    w_real = np.cos(angle) * fft_window[:, None]
    w_imag = -np.sin(angle) * fft_window[:, None]
    return w_real.astype(np.float32), w_imag.astype(np.float32)


def make_fused_weights(n_fft, win_length, compute_dtype):
    """Fused [real | imag | zero-pad] weights; last dim padded to mult of 128."""
    w_real, w_imag = make_stft_weights(n_fft, win_length)
    F = n_fft // 2 + 1
    F2pad = _round_up(2 * F, 128)
    w = np.zeros((n_fft, F2pad), np.float32)
    w[:, :F] = w_real
    w[:, F:2 * F] = w_imag
    return jnp.asarray(w, dtype=compute_dtype), F, F2pad


# ---------------------------------------------------------------------------
# Capability probes / spec helpers
# ---------------------------------------------------------------------------
@functools.lru_cache(maxsize=None)
def _sublane_roll_supported():
    """Probe whether pltpu.roll lowers for a static sublane (axis=0) rotation."""
    def _probe_kernel(x_ref, o_ref):
        o_ref[...] = pltpu.roll(x_ref[...], shift=3, axis=0)
    try:
        fn = pl.pallas_call(
            _probe_kernel,
            out_shape=jax.ShapeDtypeStruct((16, 128), jnp.float32))
        jax.block_until_ready(fn(jnp.zeros((16, 128), jnp.float32)))
        return True
    except Exception:  # noqa: BLE001 -- fall back to aligned-buffer slices
        return False


def _pinned_weight_spec(block_shape, index_map, single_buffer):
    """Constant-index weight spec; single-buffered when requested & supported."""
    if single_buffer and hasattr(pl, "Buffered"):
        try:
            return pl.BlockSpec(block_shape, index_map,
                                pipeline_mode=pl.Buffered(buffer_count=1))
        except TypeError:
            pass
    return pl.BlockSpec(block_shape, index_map)


# ---------------------------------------------------------------------------
# Kernel 1: in-kernel framing + one fused K = n_fft DFT matmul (hop | n_fft).
# ---------------------------------------------------------------------------
def _stft_framed_kernel(sig_cur_ref, sig_nxt_ref, w_ref, out_ref, *,
                        k_blocks, tile_t, compute_dtype, use_roll):
    """sig_cur_ref: (1, TILE_T, hop)     rows t .. t+TILE_T-1 of the signal
       sig_nxt_ref: (1, NEXT_ROWS, hop)  overlap head of the next tile
       w_ref:       (n_fft, F2pad)       fused [real|imag|pad] weights (pinned)
       out_ref:     (1, TILE_T, F2pad)
       Frame t = concat_i rows[t + i], i in [0, k_blocks); single K=n_fft dot.
    """
    cur = sig_cur_ref[0]                                       # (TILE_T, hop) f32
    if k_blocks > 1:
        nxt = sig_nxt_ref[0]                                   # (NEXT_ROWS, hop)
        combined = jnp.concatenate([cur, nxt], axis=0)         # aligned buffer
        rows = combined.shape[0]
        parts = [cur.astype(compute_dtype)]
        for i in range(1, k_blocks):                           # static unroll
            if use_roll:
                # XLU sublane rotation: shifted[q] = combined[q + i]
                shifted = pltpu.roll(combined, shift=rows - i, axis=0)
                part = shifted[:tile_t]                        # 8-aligned slice
            else:
                part = combined[i:i + tile_t]                  # fallback slices
            parts.append(part.astype(compute_dtype))
        frames = jnp.concatenate(parts, axis=1)                # (TILE_T, n_fft)
    else:
        frames = cur.astype(compute_dtype)
    out_ref[0] = jnp.dot(frames, w_ref[...],
                         preferred_element_type=jnp.float32)


def _stft_framed_pallas(sig_rows, w_fused, *, tile_t, next_rows, n_fft, hop,
                        num_t_tiles, compute_dtype, single_buffer_weight,
                        vmem_limit):
    B = sig_rows.shape[0]
    F2pad = w_fused.shape[1]
    k_blocks = n_fft // hop
    T_pad = num_t_tiles * tile_t
    blocks_per_tile = tile_t // next_rows
    kernel = functools.partial(
        _stft_framed_kernel, k_blocks=k_blocks, tile_t=tile_t,
        compute_dtype=compute_dtype, use_roll=_sublane_roll_supported())
    flops = 2 * B * T_pad * n_fft * F2pad
    bytes_accessed = (B * (T_pad + next_rows * num_t_tiles) * hop * 4
                      + int(w_fused.size) * w_fused.dtype.itemsize
                      + B * T_pad * F2pad * 4)
    return pl.pallas_call(
        kernel,
        out_shape=jax.ShapeDtypeStruct((B, T_pad, F2pad), jnp.float32),
        grid_spec=pltpu.PrefetchScalarGridSpec(
            num_scalar_prefetch=0,
            grid=(B, num_t_tiles),
            in_specs=[
                pl.BlockSpec((1, tile_t, hop), lambda b, j: (b, j, 0)),
                # Only the overlap head of the next tile: ~2x less input DMA
                # and less VMEM than re-fetching a full (1, tile_t, hop) block.
                pl.BlockSpec((1, next_rows, hop),
                             lambda b, j: (b, (j + 1) * blocks_per_tile, 0)),
                _pinned_weight_spec((n_fft, F2pad), lambda b, j: (0, 0),
                                    single_buffer_weight),
            ],
            out_specs=pl.BlockSpec((1, tile_t, F2pad), lambda b, j: (b, j, 0)),
        ),
        compiler_params=pltpu.CompilerParams(
            dimension_semantics=("parallel", "parallel"),
            vmem_limit_bytes=int(vmem_limit)),
        cost_estimate=pl.CostEstimate(flops=int(flops), transcendentals=0,
                                      bytes_accessed=int(bytes_accessed)),
    )(sig_rows, sig_rows, w_fused)


# ---------------------------------------------------------------------------
# Kernel 2 (fallback, general hop): K-tiled matmul over pre-framed rows.
# ---------------------------------------------------------------------------
def _stft_matmul_kernel(frames_ref, w_ref, out_ref, acc_ref):
    @pl.when(pl.program_id(1) == 0)
    def _init():
        acc_ref[...] = jnp.zeros_like(acc_ref)

    acc_ref[...] += jnp.dot(frames_ref[...], w_ref[...],
                            preferred_element_type=jnp.float32)

    @pl.when(pl.program_id(1) == pl.num_programs(1) - 1)
    def _finalize():
        out_ref[...] = acc_ref[...]


def _stft_matmul_pallas(frames, w_fused, *, tile_m, tile_k,
                        single_buffer_weight, vmem_limit):
    M_pad, n_fft = frames.shape
    F2pad = w_fused.shape[1]
    grid_m = M_pad // tile_m
    grid_k = n_fft // tile_k
    flops = 2 * M_pad * n_fft * F2pad
    bytes_accessed = (int(frames.size) * frames.dtype.itemsize
                      + int(w_fused.size) * w_fused.dtype.itemsize
                      + M_pad * F2pad * 4)
    return pl.pallas_call(
        _stft_matmul_kernel,
        out_shape=jax.ShapeDtypeStruct((M_pad, F2pad), jnp.float32),
        grid_spec=pltpu.PrefetchScalarGridSpec(
            num_scalar_prefetch=0,
            grid=(grid_m, grid_k),
            in_specs=[
                pl.BlockSpec((tile_m, tile_k), lambda i, k: (i, k)),
                _pinned_weight_spec((tile_k, F2pad), lambda i, k: (k, 0),
                                    single_buffer_weight and grid_k == 1),
            ],
            out_specs=pl.BlockSpec((tile_m, F2pad), lambda i, k: (i, 0)),
            scratch_shapes=[pltpu.VMEM((tile_m, F2pad), jnp.float32)],
        ),
        compiler_params=pltpu.CompilerParams(
            dimension_semantics=("parallel", "arbitrary"),
            vmem_limit_bytes=int(vmem_limit)),
        cost_estimate=pl.CostEstimate(flops=int(flops), transcendentals=0,
                                      bytes_accessed=int(bytes_accessed)),
    )(frames, w_fused)


# ---------------------------------------------------------------------------
# Full forward pass (semantics of STFT.forward)
# ---------------------------------------------------------------------------
def stft_forward(x, *, n_fft, hop_length=None, win_length=None, center=True,
                 pad_mode="reflect", tile_t=512, tile_m=256, use_bf16=None,
                 return_fused_padded=False):
    """x: (batch, data_length) -> (real, imag), each (batch, 1, T, n_fft//2+1).

    With return_fused_padded=True, returns (slab, T, F) where slab is the
    lane-dense (B, T_pad, F2pad) kernel output (no wrapper slicing at all).
    """
    assert pad_mode in ("constant", "reflect")
    if win_length is None:
        win_length = n_fft
    if hop_length is None:
        hop_length = win_length // 4

    B, _ = x.shape
    F = n_fft // 2 + 1
    if use_bf16 is None:
        use_bf16 = n_fft >= 512        # bf16 inputs/weights, f32 accumulation
    compute_dtype = jnp.bfloat16 if use_bf16 else jnp.float32
    csize = 2 if use_bf16 else 4
    w_fused, _, F2pad = make_fused_weights(n_fft, win_length, compute_dtype)
    wt_bytes = n_fft * F2pad * csize
    single_buf_w = n_fft >= 2048       # large pinned weights: skip double-buffer

    x = x.astype(jnp.float32)
    if center:
        x = jnp.pad(x, ((0, 0), (n_fft // 2, n_fft // 2)),
                    mode="reflect" if pad_mode == "reflect" else "constant")
    Lp = x.shape[1]
    T = (Lp - n_fft) // hop_length + 1

    fused_ok = (n_fft % hop_length == 0) and (hop_length % 128 == 0)
    if fused_ok:
        # --- fused in-kernel framing path ---
        hop = hop_length
        k_blocks = n_fft // hop
        next_rows = _round_up(max(k_blocks - 1, 1), 8)
        w_bufs = 1 if single_buf_w else 2

        def vmem_est(tt):
            return (wt_bytes * w_bufs
                    + tt * hop * 4 * 2 + next_rows * hop * 4 * 2     # inputs
                    + tt * F2pad * 4 * 2                             # output
                    + (tt + next_rows) * hop * 4 * 2                 # combined+roll
                    + tt * n_fft * csize                             # frame tile
                    + tt * F2pad * 4)                                # dot result

        tile_t_eff = max(_round_up(min(tile_t, _round_up(T, next_rows)),
                                   next_rows), next_rows)
        while tile_t_eff > next_rows and vmem_est(tile_t_eff) > _VMEM_BUDGET:
            tile_t_eff -= next_rows
        # TODO(synk): for n_fft >= 8192 the pinned weight alone exceeds the
        # budget; split F2pad over an outer grid axis in that regime.

        num_t_tiles = -(-T // tile_t_eff)
        T_pad = num_t_tiles * tile_t_eff
        R_tot = T_pad + next_rows            # extra overlap head for last tile
        need = R_tot * hop
        sig = jnp.pad(x, ((0, 0), (0, need - Lp))) if need >= Lp else x[:, :need]
        sig_rows = sig.reshape(B, R_tot, hop)
        vmem_limit = min(_VMEM_LIMIT_CAP,
                         max(32 * 1024 * 1024, vmem_est(tile_t_eff) * 5 // 4))
        out = _stft_framed_pallas(
            sig_rows, w_fused, tile_t=tile_t_eff, next_rows=next_rows,
            n_fft=n_fft, hop=hop, num_t_tiles=num_t_tiles,
            compute_dtype=compute_dtype, single_buffer_weight=single_buf_w,
            vmem_limit=vmem_limit)           # (B, T_pad, F2pad) f32
    else:
        # --- fallback path: wrapper framing + K-tiled matmul ---
        # TODO(synk): still materializes the ~(n_fft/hop)x duplicated frame
        # matrix in HBM; a gcd-row in-kernel framing would remove it.
        M = B * T
        if n_fft > 1024 and n_fft % 1024 == 0:
            tile_k = 1024
        elif n_fft > 1024 and n_fft % 512 == 0:
            tile_k = 512
        else:
            tile_k = n_fft
        w_bufs_mm = 1 if (single_buf_w and tile_k == n_fft) else 2

        def vmem_est_mm(tm):
            return (tile_k * F2pad * csize * w_bufs_mm
                    + tm * tile_k * csize * 2
                    + tm * F2pad * 4 * 2
                    + tm * F2pad * 4)

        tile_m_eff = max(min(_round_up(tile_m, 8), _round_up(M, 8)), 8)
        while tile_m_eff > 8 and vmem_est_mm(tile_m_eff) > _VMEM_BUDGET:
            tile_m_eff -= 8
        M_pad = _round_up(M, tile_m_eff)
        idx = jnp.arange(T)[:, None] * hop_length + jnp.arange(n_fft)[None, :]
        frames = x[:, idx].astype(compute_dtype).reshape(M, n_fft)
        frames = jnp.pad(frames, ((0, M_pad - M), (0, 0)))
        vmem_limit = min(_VMEM_LIMIT_CAP,
                         max(32 * 1024 * 1024, vmem_est_mm(tile_m_eff) * 5 // 4))
        out = _stft_matmul_pallas(
            frames, w_fused, tile_m=tile_m_eff, tile_k=tile_k,
            single_buffer_weight=single_buf_w, vmem_limit=vmem_limit)
        out = out[:M].reshape(B, T, F2pad)   # (B, T, F2pad) f32

    if return_fused_padded:
        return out, T, F

    # Exactly one slice per returned tensor (module-compatible shapes).
    real = out[:, :T, :F][:, None, :, :]
    imag = out[:, :T, F:2 * F][:, None, :, :]
    return real, imag


# ---------------------------------------------------------------------------
# Reference (plain NumPy, float64 accumulation) and demo / correctness check
# ---------------------------------------------------------------------------
def _reference_stft(x, n_fft, hop, win, cast_like_bf16=False):
    w_real, w_imag = make_stft_weights(n_fft, win)
    xp = np.pad(np.asarray(x, dtype=np.float32),
                ((0, 0), (n_fft // 2, n_fft // 2)), mode="reflect")
    if cast_like_bf16:
        def cast(a):
            return np.asarray(
                jnp.asarray(a).astype(jnp.bfloat16).astype(jnp.float32))
        xp, w_real, w_imag = cast(xp), cast(w_real), cast(w_imag)
    T = (xp.shape[1] - n_fft) // hop + 1
    idx = np.arange(T)[:, None] * hop + np.arange(n_fft)[None, :]
    fr = xp[:, idx].astype(np.float64)                       # (B, T, n_fft)
    rr = np.einsum("btk,kf->btf", fr, w_real.astype(np.float64))[:, None]
    ii = np.einsum("btk,kf->btf", fr, w_imag.astype(np.float64))[:, None]
    return rr.astype(np.float32), ii.astype(np.float32)


if __name__ == "__main__":
    key = jax.random.PRNGKey(0)
    k1, k2, k3 = jax.random.split(key, 3)
    B = 2

    # Config 1: fused in-kernel framing path, bf16 compute (n_fft >= 512),
    # small tile_t to force a multi-tile grid (3 time tiles).
    n_fft1, win1, hop1 = 512, 512, 128
    L1 = 4096
    x1 = jax.random.normal(k1, (B, L1), dtype=jnp.float32)
    real1, imag1 = stft_forward(x1, n_fft=n_fft1, hop_length=hop1,
                                win_length=win1, center=True,
                                pad_mode="reflect", tile_t=16)
    jax.block_until_ready((real1, imag1))

    # Config 2: fused path, f32 compute (n_fft < 512), k_blocks = 2.
    n_fft3, win3, hop3 = 256, 256, 128
    L3 = 2000
    x3 = jax.random.normal(k3, (B, L3), dtype=jnp.float32)
    real3, imag3 = stft_forward(x3, n_fft=n_fft3, hop_length=hop3,
                                win_length=win3, center=True,
                                pad_mode="reflect", tile_t=8)
    jax.block_until_ready((real3, imag3))

    # Config 3: fallback path (hop does not divide n_fft, win < n_fft), f32.
    n_fft2, win2, hop2 = 256, 200, 96
    L2 = 2000
    x2 = jax.random.normal(k2, (B, L2), dtype=jnp.float32)
    real2, imag2 = stft_forward(x2, n_fft=n_fft2, hop_length=hop2,
                                win_length=win2, center=True,
                                pad_mode="reflect", tile_m=16)
    jax.block_until_ready((real2, imag2))

    assert real1.shape == (B, 1, 33, n_fft1 // 2 + 1), real1.shape
    assert imag1.shape == (B, 1, 33, n_fft1 // 2 + 1), imag1.shape
    assert real3.shape == (B, 1, 16, n_fft3 // 2 + 1), real3.shape
    assert imag3.shape == (B, 1, 16, n_fft3 // 2 + 1), imag3.shape
    assert real2.shape == (B, 1, 21, n_fft2 // 2 + 1), real2.shape
    assert imag2.shape == (B, 1, 21, n_fft2 // 2 + 1), imag2.shape

    # bf16 path: compare against a reference that applies the same bf16 rounding
    # to signal/weights (kernel keeps f32 accumulation, so only summation order
    # and rounding-mode minutiae differ).
    rr1, ii1 = _reference_stft(x1, n_fft1, hop1, win1, cast_like_bf16=True)
    np.testing.assert_allclose(np.asarray(real1), rr1, rtol=2e-2, atol=5e-2)
    np.testing.assert_allclose(np.asarray(imag1), ii1, rtol=2e-2, atol=5e-2)

    # f32 paths: compare against the float64 NumPy reference (framing/indexing
    # bugs would show up as O(1)+ errors; tolerance only covers MXU rounding).
    rr3, ii3 = _reference_stft(x3, n_fft3, hop3, win3)
    np.testing.assert_allclose(np.asarray(real3), rr3, rtol=2e-2, atol=5e-2)
    np.testing.assert_allclose(np.asarray(imag3), ii3, rtol=2e-2, atol=5e-2)

    rr2, ii2 = _reference_stft(x2, n_fft2, hop2, win2)
    np.testing.assert_allclose(np.asarray(real2), rr2, rtol=2e-2, atol=5e-2)
    np.testing.assert_allclose(np.asarray(imag2), ii2, rtol=2e-2, atol=5e-2)

    print("KERNEL_OK")
</pallas_src>

<mosaic_0001>
module attributes {stable_mosaic.version = 11 : i64} {
  func.func @_probe_kernel(%arg0: memref<16x128xf32, #tpu.memory_space<vmem>>, %arg1: memref<16x128xf32, #tpu.memory_space<vmem>>) attributes {dimension_semantics = [], scalar_prefetch = 0 : i64, scratch_operands = 0 : i64, tpu.core_type = #tpu.core_type<tc>} {
    %c0 = arith.constant 0 : index
    %c0_0 = arith.constant 0 : index
    %0 = vector.load %arg0[%c0, %c0_0] : memref<16x128xf32, #tpu.memory_space<vmem>>, vector<16x128xf32>
    %c3_i32 = arith.constant 3 : i32
    %1 = tpu.dynamic_rotate %0 by %c3_i32 dim 0 : vector<16x128xf32>, i32 -> vector<16x128xf32>
    %c0_1 = arith.constant 0 : index
    %c0_2 = arith.constant 0 : index
    %2 = vector.load %arg1[%c0_1, %c0_2] : memref<16x128xf32, #tpu.memory_space<vmem>>, vector<16x128xf32>
    tpu.vector_store %arg1[%c0_1, %c0_2], %1 {strides = array<i32>} : memref<16x128xf32, #tpu.memory_space<vmem>>, vector<16x128xf32>,
    return
  }
}

module attributes {stable_mosaic.version = 11 : i64} {
  func.func @_stft_framed_kernel(%arg0: i32, %arg1: i32, %arg2: memref<1x16x128xf32, #tpu.memory_space<vmem>>, %arg3: memref<1x8x128xf32, #tpu.memory_space<vmem>>, %arg4: memref<512x640xbf16, #tpu.memory_space<vmem>>, %arg5: memref<1x16x640xf32, #tpu.memory_space<vmem>>) attributes {dimension_semantics = [#tpu.dimension_semantics<parallel>, #tpu.dimension_semantics<parallel>], iteration_bounds = array<i64: 2, 3>, scalar_prefetch = 0 : i64, scratch_operands = 0 : i64, tpu.core_type = #tpu.core_type<tc>, window_params = [{transform_indices = @transform_0, window_bounds = array<i64: 1, 16, 128>}, {transform_indices = @transform_1, window_bounds = array<i64: 1, 8, 128>}, {pipeline_mode = #tpu.pipeline_mode<synchronous>, transform_indices = @transform_2, window_bounds = array<i64: 512, 640>}, {transform_indices = @transform_3, window_bounds = array<i64: 1, 16, 640>}]} {
    %c0 = arith.constant 0 : index
    %c0_0 = arith.constant 0 : index
    %c0_1 = arith.constant 0 : index
    %0 = vector.load %arg2[%c0, %c0_0, %c0_1] : memref<1x16x128xf32, #tpu.memory_space<vmem>>, vector<1x16x128xf32>
    %1 = vector.shape_cast %0 : vector<1x16x128xf32> to vector<16x128xf32>
    %c0_2 = arith.constant 0 : index
    %c0_3 = arith.constant 0 : index
    %c0_4 = arith.constant 0 : index
    %2 = vector.load %arg3[%c0_2, %c0_3, %c0_4] : memref<1x8x128xf32, #tpu.memory_space<vmem>>, vector<1x8x128xf32>
    %3 = vector.shape_cast %2 : vector<1x8x128xf32> to vector<8x128xf32>
    %4 = tpu.concatenate %1, %3 in 0 : vector<16x128xf32>, vector<8x128xf32> -> vector<24x128xf32>
    %5 = arith.truncf %1 : vector<16x128xf32> to vector<16x128xbf16>
    %6 = vector.extract_strided_slice %4 {offsets = [1, 0], sizes = [16, 128], strides = [1, 1]} : vector<24x128xf32> to vector<16x128xf32>
    %7 = arith.truncf %6 : vector<16x128xf32> to vector<16x128xbf16>
    %8 = vector.extract_strided_slice %4 {offsets = [2, 0], sizes = [16, 128], strides = [1, 1]} : vector<24x128xf32> to vector<16x128xf32>
    %9 = arith.truncf %8 : vector<16x128xf32> to vector<16x128xbf16>
    %10 = vector.extract_strided_slice %4 {offsets = [3, 0], sizes = [16, 128], strides = [1, 1]} : vector<24x128xf32> to vector<16x128xf32>
    %11 = arith.truncf %10 : vector<16x128xf32> to vector<16x128xbf16>
    %12 = tpu.concatenate %5, %7, %9, %11 in 1 : vector<16x128xbf16>, vector<16x128xbf16>, vector<16x128xbf16>, vector<16x128xbf16> -> vector<16x512xbf16>
    %c0_5 = arith.constant 0 : index
    %c0_6 = arith.constant 0 : index
    %13 = vector.load %arg4[%c0_5, %c0_6] : memref<512x640xbf16, #tpu.memory_space<vmem>>, vector<512x640xbf16>
    %cst = arith.constant dense<0.000000e+00> : vector<16x640xf32>
    %14 = tpu.matmul %12, %13, %cst {dimension_numbers = #tpu.dot_dimension_numbers<[1], [0], [0], [1], [0, 0, 1, 1], [], []>} : vector<16x512xbf16>, vector<512x640xbf16>, vector<16x640xf32> -> vector<16x640xf32>
    %c0_7 = arith.constant 0 : index
    %c0_8 = arith.constant 0 : index
    %c0_9 = arith.constant 0 : index
    %15 = vector.load %arg5[%c0_7, %c0_8, %c0_9] : memref<1x16x640xf32, #tpu.memory_space<vmem>>, vector<1x16x640xf32>
    %16 = vector.shape_cast %15 : vector<1x16x640xf32> to vector<16x640xf32>
    %17 = vector.shape_cast %14 : vector<16x640xf32> to vector<1x16x640xf32>
    tpu.vector_store %arg5[%c0_7, %c0_8, %c0_9], %17 {strides = array<i32>} : memref<1x16x640xf32, #tpu.memory_space<vmem>>, vector<1x16x640xf32>,
    return
  }
  func.func @transform_0(%arg0: i32, %arg1: i32) -> (i32, i32, i32) {
    %c0_i32 = arith.constant 0 : i32
    %c0_i32_0 = arith.constant 0 : i32
    return %arg0, %arg1, %c0_i32 : i32, i32, i32
  }
  func.func @transform_1(%arg0: i32, %arg1: i32) -> (i32, i32, i32) {
    %c1_i32 = arith.constant 1 : i32
    %0 = arith.addi %arg1, %c1_i32 : i32
    %c2_i32 = arith.constant 2 : i32
    %1 = arith.muli %0, %c2_i32 : i32
    %c0_i32 = arith.constant 0 : i32
    %c0_i32_0 = arith.constant 0 : i32
    return %arg0, %1, %c0_i32 : i32, i32, i32
  }
  func.func @transform_2(%arg0: i32, %arg1: i32) -> (i32, i32) {
    %c0_i32 = arith.constant 0 : i32
    %c0_i32_0 = arith.constant 0 : i32
    %c0_i32_1 = arith.constant 0 : i32
    return %c0_i32, %c0_i32_0 : i32, i32
  }
  func.func @transform_3(%arg0: i32, %arg1: i32) -> (i32, i32, i32) {
    %c0_i32 = arith.constant 0 : i32
    %c0_i32_0 = arith.constant 0 : i32
    return %arg0, %arg1, %c0_i32 : i32, i32, i32
  }
}

</mosaic_0001>

<llo_original>
// kernel: tpu_custom_call.1
$region0: #{tpu_custom_call.1}
  #allocation0 [shape = 'u32[]', space=smem, size = 0x4, offset = 0x4, fixed_abs, tag = 'smem constant byte address 0x4 - core index']
  #allocation1 [shape = 'u32[144,128]{1,0:T(1,128)}', space=vmem, size = 0x12000, scoped, tag = 'internal scratch']
  %s0 = inlined_call_operand.hbm [shape: f32[16,128], index: 0, kind: input, shape index: {}]
  %s1 = inlined_call_operand.hbm [shape: f32[16,128], index: 1, kind: output, shape index: {}]
  %s2 = sld [smem:[#allocation0]]
  $region18: #{tpu_custom_call.1} parent=0
    _
  %s4 = ssub.s32 1, %s2
  %s5 = scalar_select 0, %s4, %s2
  $region1: #{tpu_custom_call.1} parent=0
    #allocation2 [shape = 'u8[8192]{0}', space=vmem, size = 0x2000, scoped, tag = 'input window, operand 0, single buffered']
    #allocation3 [shape = 's32[1]{0}', space=sflag, size = 0x4, scoped, tag = 'scoped memory for tpu_custom_call.1']
    #allocation4 [shape = 's32[1]{0}', space=sflag, size = 0x4, scoped, tag = 'scoped memory for tpu_custom_call.1']
    #allocation5 [shape = 'u8[8192]{0}', space=vmem, size = 0x2000, scoped, tag = 'output window, operand 0, single buffered']
    %6 = vsyncpa [#allocation3], 0
    %7 = vsyncpa [#allocation4], 0
    // Predicated region
    $region2: #{tpu_custom_call.1} parent=1 // pred_check
      _
    $region3: #{tpu_custom_call.1} parent=1 // pred_check_branch
      %9 = sbr.rel (0) target = $region5
    $region4: #{tpu_custom_call.1} parent=1 // pred_region
      %s11 = ssub.s32 256, 256
      %12 = vsyncadd [#allocation3], %s11
      %s13 = sshll.u32 [#allocation2], 4
      %s14 = int_to_ptr.vmem [resolvable:$true] %s13
      %19 = dma.hbm_to_vmem [thread:$0]  %s0, 256, %s14, [#allocation3], 128, 128, 8
    $region5: #{tpu_custom_call.1} parent=1 // pred_fallthru
      _
    // Predicated region
    $region6: #{tpu_custom_call.1} parent=1 // pred_check
      _
    $region7: #{tpu_custom_call.1} parent=1 // pred_check_branch
      %21 = sbr.rel (0) target = $region9
    $region8: #{tpu_custom_call.1} parent=1 // pred_region
      %22 = dma.done [#allocation3], 256
    $region9: #{tpu_custom_call.1} parent=1 // pred_fallthru
      _
    %v23 = vld [vmem:[#allocation2] sm:$0xff]
    %v24 = vld [vmem:[#allocation2 + $0x8] sm:$0xff]
    %v25 = vrot.slane %v23, 5
    %v26 = vrot.slane %v24, 5
    %v27 = vlaneseq
    %v28 = vshrl.u32 %v27, 7
    %vm29 = vcmp.lt.s32.totalorder %v28, 3
    %v30 = vsel %vm29, %v25, %v26
    %v31 = vsel %vm29, %v26, %v25
    %32 = vst [vmem:[#allocation5] sm:$0xff] %v31
    %33 = vst [vmem:[#allocation5 + $0x8] sm:$0xff] %v30
    // Predicated region
    $region10: #{tpu_custom_call.1} parent=1 // pred_check
      _
    $region11: #{tpu_custom_call.1} parent=1 // pred_check_branch
      %35 = sbr.rel (0) target = $region13
    $region12: #{tpu_custom_call.1} parent=1 // pred_region
      %s37 = ssub.s32 256, 256
      %38 = vsyncadd [#allocation4], %s37
      %s39 = sshll.u32 [#allocation5], 4
      %s40 = int_to_ptr.vmem [resolvable:$true] %s39
      %45 = dma.vmem_to_hbm [thread:$0]  %s40, 256, %s1, [#allocation4], 128, 128, 8
    $region13: #{tpu_custom_call.1} parent=1 // pred_fallthru
      _
    // Predicated region
    $region14: #{tpu_custom_call.1} parent=1 // pred_check
      _
    $region15: #{tpu_custom_call.1} parent=1 // pred_check_branch
      %47 = sbr.rel (0) target = $region17
    $region16: #{tpu_custom_call.1} parent=1 // pred_region
      %48 = dma.done [#allocation4], 256
    $region17: #{tpu_custom_call.1} parent=1 // pred_fallthru
      _
    %49 = vsyncpa [#allocation3], 1
    %50 = vsyncpa [#allocation4], 1

// kernel: tpu_custom_call.1
$region0: #{tpu_custom_call.1}
  #allocation0 [shape = 'u32[]', space=smem, size = 0x4, offset = 0x4, fixed_abs, tag = 'smem constant byte address 0x4 - core index']
  #allocation1 [shape = 'u32[144,128]{1,0:T(1,128)}', space=vmem, size = 0x12000, scoped, tag = 'internal scratch']
  %s0 = inlined_call_operand.hbm [shape: f32[2,56,128], index: 0, kind: input, shape index: {}]
  %s1 = inlined_call_operand.hbm [shape: f32[2,56,128], index: 1, kind: input, shape index: {}]
  %s2 = inlined_call_operand.hbm [shape: bf16[512,640], index: 2, kind: input, shape index: {}]
  %s3 = inlined_call_operand.hbm [shape: f32[2,48,640], index: 3, kind: output, shape index: {}]
  %s4 = sld [smem:[#allocation0]]
  $region57: #{tpu_custom_call.1} parent=0
    _
  %s6 = ssub.s32 1, %s4
  %s7 = scalar_select 0, %s6, %s4
  $region1: #{tpu_custom_call.1} parent=0
    #allocation2 [shape = 'u8[16384]{0}', space=vmem, size = 0x4000, scoped, tag = 'input window, operand 0']
    #allocation3 [shape = 's32[2]{0}', space=sflag, size = 0x8, scoped, tag = 'scoped memory for tpu_custom_call.1']
    #allocation4 [shape = 's32[2]{0}', space=sflag, size = 0x8, scoped, tag = 'scoped memory for tpu_custom_call.1']
    #allocation5 [shape = 'u8[8192]{0}', space=vmem, size = 0x2000, scoped, tag = 'input window, operand 1']
    #allocation6 [shape = 's32[2]{0}', space=sflag, size = 0x8, scoped, tag = 'scoped memory for tpu_custom_call.1']
    #allocation7 [shape = 'u8[655360]{0}', space=vmem, size = 0xa0000, scoped, tag = 'input window, operand 2, single buffered']
    #allocation8 [shape = 'u8[81920]{0}', space=vmem, size = 0x14000, scoped, tag = 'output window, operand 0']
    %8 = vsyncpa [#allocation3], 0
    %s9 = scalar_lea.sflag [#allocation3], 1
    %10 = vsyncpa %s9, 0
    %11 = vsyncpa [#allocation6], 0
    %s12 = scalar_lea.sflag [#allocation6], 1
    %13 = vsyncpa %s12, 0
    %14 = vsyncpa [#allocation4], 0
    %s15 = scalar_lea.sflag [#allocation4], 1
    %16 = vsyncpa %s15, 0
    loop: start=0, step=1, limit=8
    $region2: #{tpu_custom_call.1} parent=1 // loop_pre_header
      _
    $region3: #{tpu_custom_call.1} parent=1 // loop_header
      %s18 = sphi 0, %s22
      %p19 = scmp.ge.s32.totalorder %s18, 8
      %s25 = sphi 0, %s37
      %s26 = sphi 0, %s33
      %s27 = sphi 0, %s25
      %s28 = sphi 0, %s26
      %s29 = sphi 0, %s27
      %s30 = sphi 0, %s28
      %s42 = sphi 0, %s44
      %s45 = sphi 0, %s42
      %s46 = sphi 0, %s45
      %s62 = sphi 0, %s46
      %s74 = sphi 0, %s76
      %s77 = sphi 0, %s74
      %s78 = sphi 0, %s77
      %s94 = sphi 0, %s78
      %s98 = sphi 0, %s98
      %s100 = sphi 0, %s98
      %s101 = sphi 0, %s100
      %s115 = sphi 0, %s101
      %s123 = sphi 0, %s125
      %s126 = sphi 0, %s123
      %s127 = sphi 0, %s126
      %s143 = sphi 0, %s127
    $region4: #{tpu_custom_call.1} parent=1 // loop_header_branch
      %21 = sbr.rel (%p19) target = $region8
    $region5: #{tpu_custom_call.1} parent=1 // loop_body
      %s23 = ssub.s32 %s18, 1
      %s24 = ssub.s32 %s18, 2
      %s31 = sadd.s32 1, %s26
      %p32 = scmp.ge.s32.totalorder %s31, 3
      %s33 = scalar_select %p32, 0, %s31
      %s34 = sadd.s32 1, %s25
      %s35 = scalar_select %p32, %s34, %s25
      %p36 = scmp.ge.s32.totalorder %s35, 2
      %s37 = scalar_select %p36, 0, %s35
      %s38 = ssub.s32 %s25, %s37
      %s39 = ssub.s32 %s26, %s33
      %s40 = sor.u32 %s38, %s39
      %p41 = scmp.eq.s32.totalorder %s40, 0
      %s43 = sadd.s32 %s42, 1
      %s44 = scalar_select %p41, %s42, %s43
      %p47 = pneg %p41
      %p48 = scmp.eq.s32.totalorder %s18, 5
      %p49 = por %p47, %p48
      %p50 = scmp.ne.s32.totalorder %s42, %s45
      %p51 = scmp.eq.s32.totalorder %s18, 0
      %p52 = por %p50, %p51
      %p53 = scmp.ne.s32.totalorder %s42, %s45
      %p54 = scmp.eq.s32.totalorder %s23, 5
      %p55 = por %p53, %p54
      %p56 = scmp.ne.s32.totalorder %s45, %s46
      %p57 = scmp.eq.s32.totalorder %s23, 0
      %p58 = por %p56, %p57
      %p59 = scmp.ne.s32.totalorder %s45, %s46
      %p60 = scmp.eq.s32.totalorder %s24, 5
      %p61 = por %p59, %p60
      %p63 = scmp.ne.s32.totalorder %s46, %s62
      %p64 = scmp.eq.s32.totalorder %s24, 0
      %p65 = por %p63, %p64
      %s66 = sadd.s32 %s26, 1
      %s67 = smul.u32 %s66, 2
      %s68 = sadd.s32 %s33, 1
      %s69 = smul.u32 %s68, 2
      %s70 = ssub.s32 %s25, %s37
      %s71 = ssub.s32 %s67, %s69
      %s72 = sor.u32 %s70, %s71
      %p73 = scmp.eq.s32.totalorder %s72, 0
      %s75 = sadd.s32 %s74, 1
      %s76 = scalar_select %p73, %s74, %s75
      %p79 = pneg %p73
      %p80 = scmp.eq.s32.totalorder %s18, 5
      %p81 = por %p79, %p80
      %p82 = scmp.ne.s32.totalorder %s74, %s77
      %p83 = scmp.eq.s32.totalorder %s18, 0
      %p84 = por %p82, %p83
      %p85 = scmp.ne.s32.totalorder %s74, %s77
      %p86 = scmp.eq.s32.totalorder %s23, 5
      %p87 = por %p85, %p86
      %p88 = scmp.ne.s32.totalorder %s77, %s78
      %p89 = scmp.eq.s32.totalorder %s23, 0
      %p90 = por %p88, %p89
      %p91 = scmp.ne.s32.totalorder %s77, %s78
      %p92 = scmp.eq.s32.totalorder %s24, 5
      %p93 = por %p91, %p92
      %p95 = scmp.ne.s32.totalorder %s78, %s94
      %p96 = scmp.eq.s32.totalorder %s24, 0
      %p97 = por %p95, %p96
      %s99 = sadd.s32 %s98, 1
      %p102 = scmp.eq.s32.totalorder %s18, 5
      %p103 = scmp.ne.s32.totalorder %s98, %s100
      %p104 = scmp.eq.s32.totalorder %s18, 0
      %p105 = por %p103, %p104
      %p106 = scmp.ne.s32.totalorder %s98, %s100
      %p107 = scmp.eq.s32.totalorder %s23, 5
      %p108 = por %p106, %p107
      %p109 = scmp.ne.s32.totalorder %s100, %s101
      %p110 = scmp.eq.s32.totalorder %s23, 0
      %p111 = por %p109, %p110
      %p112 = scmp.ne.s32.totalorder %s100, %s101
      %p113 = scmp.eq.s32.totalorder %s24, 5
      %p114 = por %p112, %p113
      %p116 = scmp.ne.s32.totalorder %s101, %s115
      %p117 = scmp.eq.s32.totalorder %s24, 0
      %p118 = por %p116, %p117
      %s119 = ssub.s32 %s25, %s37
      %s120 = ssub.s32 %s26, %s33
      %s121 = sor.u32 %s119, %s120
      %p122 = scmp.eq.s32.totalorder %s121, 0
      %s124 = sadd.s32 %s123, 1
      %s125 = scalar_select %p122, %s123, %s124
      %p128 = pneg %p122
      %p129 = scmp.eq.s32.totalorder %s18, 5
      %p130 = por %p128, %p129
      %p131 = scmp.ne.s32.totalorder %s123, %s126
      %p132 = scmp.eq.s32.totalorder %s18, 0
      %p133 = por %p131, %p132
      %p134 = scmp.ne.s32.totalorder %s123, %s126
      %p135 = scmp.eq.s32.totalorder %s23, 5
      %p136 = por %p134, %p135
      %p137 = scmp.ne.s32.totalorder %s126, %s127
      %p138 = scmp.eq.s32.totalorder %s23, 0
      %p139 = por %p137, %p138
      %p140 = scmp.ne.s32.totalorder %s126, %s127
      %p141 = scmp.eq.s32.totalorder %s24, 5
      %p142 = por %p140, %p141
      %p144 = scmp.ne.s32.totalorder %s127, %s143
      %p145 = scmp.eq.s32.totalorder %s24, 0
      %p146 = por %p144, %p145
      %p147 = scmp.le.s32.totalorder 1, %s18
      %p148 = scmp.lt.s32.totalorder %s18, 7
      %p149 = pnand %p147, %p148
      %p150 = pneg %p149
      // Predicated region
      $region9: #{tpu_custom_call.1} parent=5 // pred_check
        _
      $region10: #{tpu_custom_call.1} parent=5 // pred_check_branch
        %152 = sbr.rel (%p149) target = $region12
      $region11: #{tpu_custom_call.1} parent=5 // pred_region
        %s153 = ssub.s32 %s18, 1
        // Predicated region
        $region13: #{tpu_custom_call.1} parent=11 // pred_check
          %p154 = pneg %p111
        $region14: #{tpu_custom_call.1} parent=11 // pred_check_branch
          %156 = sbr.rel (%p154) target = $region16
        $region15: #{tpu_custom_call.1} parent=11 // pred_region
          %s158 = ssub.s32 20480, 20480
          %159 = vsyncadd [#allocation6], %s158
          %s160 = sshll.u32 [#allocation7], 4
          %s161 = int_to_ptr.vmem [resolvable:$true] %s160
          %166 = dma.hbm_to_vmem [thread:$0]  %s2, 20480, %s161, [#allocation6], 320, 320, 20
        $region16: #{tpu_custom_call.1} parent=11 // pred_fallthru
          _
      $region12: #{tpu_custom_call.1} parent=5 // pred_fallthru
        _
      %p167 = scmp.lt.s32.totalorder %s18, 6
      // Predicated region
      $region17: #{tpu_custom_call.1} parent=5 // pred_check
        %p168 = pneg %p167
      $region18: #{tpu_custom_call.1} parent=5 // pred_check_branch
        %170 = sbr.rel (%p168) target = $region20
      $region19: #{tpu_custom_call.1} parent=5 // pred_region
        // Predicated region
        $region21: #{tpu_custom_call.1} parent=19 // pred_check
          %p171 = pneg %p52
        $region22: #{tpu_custom_call.1} parent=19 // pred_check_branch
          %173 = sbr.rel (%p171) target = $region24
        $region23: #{tpu_custom_call.1} parent=19 // pred_region
          %s174 = sand.u32 %s42, 1
          %s175 = scalar_lea.sflag [#allocation3], %s174
          %s176 = sand.u32 %s42, 1
          %s177 = smul.addr %s176, 16
          %s178 = scalar_lea.vmem [#allocation2], %s177
          %s179 = smul.u32 2, %s26
          %s180 = ssub.s32 7, %s179
          %p181 = scmp.lt.s32.totalorder %s180, 2
          %s182 = scalar_select %p181, %s180, 2
          %s183 = smul.u32 128, %s182
          %s185 = ssub.s32 256, %s183
          %186 = vsyncadd %s175, %s185
          %p187 = scmp.ne.s32.totalorder 0, %s183
          %s188 = smul.addr %s25, 7
          %s189 = sadd.s32 %s179, %s188
          %s190 = smul.addr %s189, 128
          %s191 = scalar_lea.hbm %s0, %s190
          %s192 = smul.u32 8, %s182
          %s193 = sshll.u32 %s178, 4
          %s194 = int_to_ptr.vmem [resolvable:$true] %s193
          %s195 = sshll.u32 %s192, 4
          %199 = dma.hbm_to_vmem [thread:$0]  (%p187), %s191, %s195, %s194, %s175, 128, 128, 8
        $region24: #{tpu_custom_call.1} parent=19 // pred_fallthru
          _
        // Predicated region
        $region25: #{tpu_custom_call.1} parent=19 // pred_check
          %p200 = pneg %p84
        $region26: #{tpu_custom_call.1} parent=19 // pred_check_branch
          %202 = sbr.rel (%p200) target = $region28
        $region27: #{tpu_custom_call.1} parent=19 // pred_region
          %s203 = sand.u32 %s18, 1
          %s204 = scalar_lea.sflag [#allocation6], %s203
          %s205 = sand.u32 %s74, 1
          %s206 = smul.addr %s205, 8
          %s207 = scalar_lea.vmem [#allocation5], %s206
          %s208 = sadd.s32 %s26, 1
          %s209 = smul.u32 %s208, 2
          %s211 = ssub.s32 128, 128
          %212 = vsyncadd %s204, %s211
          %s213 = smul.addr %s25, 7
          %s214 = sadd.s32 %s209, %s213
          %s215 = smul.addr %s214, 128
          %s216 = scalar_lea.hbm %s1, %s215
          %s218 = sshll.u32 %s207, 4
          %s219 = int_to_ptr.vmem [resolvable:$true] %s218
          %221 = dma.hbm_to_vmem [thread:$0]  %s216, 128, %s219, %s204
        $region28: #{tpu_custom_call.1} parent=19 // pred_fallthru
          _
      $region20: #{tpu_custom_call.1} parent=5 // pred_fallthru
        _
      %p222 = scmp.le.s32.totalorder 1, %s18
      %p223 = scmp.lt.s32.totalorder %s18, 7
      %p224 = pnand %p222, %p223
      %p225 = pneg %p224
      // Predicated region
      $region29: #{tpu_custom_call.1} parent=5 // pred_check
        _
      $region30: #{tpu_custom_call.1} parent=5 // pred_check_branch
        %227 = sbr.rel (%p224) target = $region32
      $region31: #{tpu_custom_call.1} parent=5 // pred_region
        %s228 = ssub.s32 %s18, 1
        %s229 = sand.u32 %s45, 1
        %s230 = scalar_lea.sflag [#allocation3], %s229
        %s231 = sand.u32 %s45, 1
        %s232 = smul.addr %s231, 16
        %s233 = scalar_lea.vmem [#allocation2], %s232
        // Predicated region
        $region33: #{tpu_custom_call.1} parent=31 // pred_check
          %p234 = pneg %p58
        $region34: #{tpu_custom_call.1} parent=31 // pred_check_branch
          %236 = sbr.rel (%p234) target = $region36
        $region35: #{tpu_custom_call.1} parent=31 // pred_region
          %237 = dma.done %s230, 256
        $region36: #{tpu_custom_call.1} parent=31 // pred_fallthru
          _
        %s238 = sand.u32 %s23, 1
        %s239 = scalar_lea.sflag [#allocation6], %s238
        %s240 = sand.u32 %s77, 1
        %s241 = smul.addr %s240, 8
        %s242 = scalar_lea.vmem [#allocation5], %s241
        // Predicated region
        $region37: #{tpu_custom_call.1} parent=31 // pred_check
          %p243 = pneg %p90
        $region38: #{tpu_custom_call.1} parent=31 // pred_check_branch
          %245 = sbr.rel (%p243) target = $region40
        $region39: #{tpu_custom_call.1} parent=31 // pred_region
          %246 = dma.done %s239, 128
        $region40: #{tpu_custom_call.1} parent=31 // pred_fallthru
          _
        // Predicated region
        $region41: #{tpu_custom_call.1} parent=31 // pred_check
          %p247 = pneg %p111
        $region42: #{tpu_custom_call.1} parent=31 // pred_check_branch
          %249 = sbr.rel (%p247) target = $region44
        $region43: #{tpu_custom_call.1} parent=31 // pred_region
          %250 = dma.done [#allocation6], 20480
        $region44: #{tpu_custom_call.1} parent=31 // pred_fallthru
          _
        %s251 = sand.u32 %s45, 1
        %s252 = scalar_lea.sflag [#allocation3], %s251
        %s253 = sand.u32 %s45, 1
        %s254 = smul.addr %s253, 16
        %s255 = scalar_lea.vmem [#allocation2], %s254
        %p256 = pneg %p58
        %p257 = pneg %p55
        %s258 = sand.u32 %s23, 1
        %s259 = scalar_lea.sflag [#allocation6], %s258
        %s260 = sand.u32 %s77, 1
        %s261 = smul.addr %s260, 8
        %s262 = scalar_lea.vmem [#allocation5], %s261
        %p263 = pneg %p90
        %p264 = pneg %p87
        %p265 = pneg %p111
        %p266 = pneg %p108
        %p267 = pneg %p139
        %p268 = pneg %p136
        %s269 = sand.u32 %s126, 1
        %s270 = scalar_lea.sflag [#allocation4], %s269
        %s271 = sand.u32 %s126, 1
        %s272 = smul.addr %s271, 80
        %s273 = scalar_lea.vmem [#allocation8], %s272
        %s274 = smul.u32 2, %s28
        %s275 = ssub.s32 7, %s274
        %p276 = scmp.lt.s32.totalorder %s275, 2
        %s277 = scalar_select %p276, %s275, 2
        %s278 = smul.u32 128, %s277
        %s279 = sadd.s32 %s28, 1
        %s280 = smul.u32 %s279, 2
        %s281 = smul.u32 2, %s28
        %v283 = vld [vmem:[%s233] sm:$0xff]
        %v284 = vld [vmem:[%s233 + $0x8] sm:$0xff]
        %v285 = vld [vmem:[%s242] sm:$0xff]
        %v286 = vpack.c.bf16 %v284, %v283
        %v287 = vpack.c.bf16 %v285, %v285
        %vm288 = vsmask.f32 7424
        %v290 = vshrl.u32 %v286, 16
        %v292 = vshll.u32 %v286, 16
        %v294 = vrot.slane %v292, 1
        %v295 = vor.u32 %v290, %v294
        %v297 = vshll.u32 %v287, 16
        %v299 = vrot.slane %v297, 1
        %v300 = vsel %vm288, %v295, %v299
        %vm304 = vcmask 1046528
        %v305 = vrot.slane %v286, 1
        %v306 = vrot.slane %v287, 1
        %v307 = vsel %vm304, %v305, %v306
        %vm309 = vsmask.f32 6400
        %v310 = vrot.slane %v290, 1
        %v311 = vrot.slane %v292, 2
        %v312 = vor.u32 %v310, %v311
        %v313 = vshrl.u32 %v287, 16
        %v315 = vrot.slane %v313, 1
        %v316 = vrot.slane %v297, 2
        %v317 = vor.u32 %v315, %v316
        %v318 = vsel %vm309, %v312, %v317
        %v320 = vld [vmem:[#allocation7] sm:$0xff]
        %v321 = vld [vmem:[#allocation7 + $0x8] sm:$0xff]
        %v322 = vld [vmem:[#allocation7 + $0x10] sm:$0xf]
        %v323 = vld [vmem:[#allocation7 + $0x14] sm:$0xff]
        %v324 = vld [vmem:[#allocation7 + $0x1c] sm:$0xff]
        %v325 = vld [vmem:[#allocation7 + $0x24] sm:$0xf]
        %v326 = vld [vmem:[#allocation7 + $0x28] sm:$0xff]
        %v327 = vld [vmem:[#allocation7 + $0x30] sm:$0xff]
        %v328 = vld [vmem:[#allocation7 + $0x38] sm:$0xf]
        %v329 = vld [vmem:[#allocation7 + $0x3c] sm:$0xff]
        %v330 = vld [vmem:[#allocation7 + $0x44] sm:$0xff]
        %v331 = vld [vmem:[#allocation7 + $0x4c] sm:$0xf]
        %v332 = vld [vmem:[#allocation7 + $0x50] sm:$0xff]
        %v333 = vld [vmem:[#allocation7 + $0x58] sm:$0xff]
        %v334 = vld [vmem:[#allocation7 + $0x60] sm:$0xf]
        %v335 = vld [vmem:[#allocation7 + $0x64] sm:$0xff]
        %v336 = vld [vmem:[#allocation7 + $0x6c] sm:$0xff]
        %v337 = vld [vmem:[#allocation7 + $0x74] sm:$0xf]
        %v338 = vld [vmem:[#allocation7 + $0x78] sm:$0xff]
        %v339 = vld [vmem:[#allocation7 + $0x80] sm:$0xff]
        %v340 = vld [vmem:[#allocation7 + $0x88] sm:$0xf]
        %v341 = vld [vmem:[#allocation7 + $0x8c] sm:$0xff]
        %v342 = vld [vmem:[#allocation7 + $0x94] sm:$0xff]
        %v343 = vld [vmem:[#allocation7 + $0x9c] sm:$0xf]
        %v344 = vld [vmem:[#allocation7 + $0xa0] sm:$0xff]
        %v345 = vld [vmem:[#allocation7 + $0xa8] sm:$0xff]
        %v346 = vld [vmem:[#allocation7 + $0xb0] sm:$0xf]
        %v347 = vld [vmem:[#allocation7 + $0xb4] sm:$0xff]
        %v348 = vld [vmem:[#allocation7 + $0xbc] sm:$0xff]
        %v349 = vld [vmem:[#allocation7 + $0xc4] sm:$0xf]
        %v350 = vld [vmem:[#allocation7 + $0xc8] sm:$0xff]
        %v351 = vld [vmem:[#allocation7 + $0xd0] sm:$0xff]
        %v352 = vld [vmem:[#allocation7 + $0xd8] sm:$0xf]
        %v353 = vld [vmem:[#allocation7 + $0xdc] sm:$0xff]
        %v354 = vld [vmem:[#allocation7 + $0xe4] sm:$0xff]
        %v355 = vld [vmem:[#allocation7 + $0xec] sm:$0xf]
        %v356 = vld [vmem:[#allocation7 + $0xf0] sm:$0xff]
        %v357 = vld [vmem:[#allocation7 + $0xf8] sm:$0xff]
        %v358 = vld [vmem:[#allocation7 + $0x100] sm:$0xf]
        %v359 = vld [vmem:[#allocation7 + $0x104] sm:$0xff]
        %v360 = vld [vmem:[#allocation7 + $0x10c] sm:$0xff]
        %v361 = vld [vmem:[#allocation7 + $0x114] sm:$0xf]
        %v362 = vld [vmem:[#allocation7 + $0x118] sm:$0xff]
        %v363 = vld [vmem:[#allocation7 + $0x120] sm:$0xff]
        %v364 = vld [vmem:[#allocation7 + $0x128] sm:$0xf]
        %v365 = vld [vmem:[#allocation7 + $0x12c] sm:$0xff]
        %v366 = vld [vmem:[#allocation7 + $0x134] sm:$0xff]
        %v367 = vld [vmem:[#allocation7 + $0x13c] sm:$0xf]
        %v368 = vld [vmem:[#allocation7 + $0x140] sm:$0xff]
        %v369 = vld [vmem:[#allocation7 + $0x148] sm:$0xff]
        %v370 = vld [vmem:[#allocation7 + $0x150] sm:$0xf]
        %v371 = vld [vmem:[#allocation7 + $0x154] sm:$0xff]
        %v372 = vld [vmem:[#allocation7 + $0x15c] sm:$0xff]
        %v373 = vld [vmem:[#allocation7 + $0x164] sm:$0xf]
        %v374 = vld [vmem:[#allocation7 + $0x168] sm:$0xff]
        %v375 = vld [vmem:[#allocation7 + $0x170] sm:$0xff]
        %v376 = vld [vmem:[#allocation7 + $0x178] sm:$0xf]
        %v377 = vld [vmem:[#allocation7 + $0x17c] sm:$0xff]
        %v378 = vld [vmem:[#allocation7 + $0x184] sm:$0xff]
        %v379 = vld [vmem:[#allocation7 + $0x18c] sm:$0xf]
        %v380 = vld [vmem:[#allocation7 + $0x190] sm:$0xff]
        %v381 = vld [vmem:[#allocation7 + $0x198] sm:$0xff]
        %v382 = vld [vmem:[#allocation7 + $0x1a0] sm:$0xf]
        %v383 = vld [vmem:[#allocation7 + $0x1a4] sm:$0xff]
        %v384 = vld [vmem:[#allocation7 + $0x1ac] sm:$0xff]
        %v385 = vld [vmem:[#allocation7 + $0x1b4] sm:$0xf]
        %v386 = vld [vmem:[#allocation7 + $0x1b8] sm:$0xff]
        %v387 = vld [vmem:[#allocation7 + $0x1c0] sm:$0xff]
        %v388 = vld [vmem:[#allocation7 + $0x1c8] sm:$0xf]
        %v389 = vld [vmem:[#allocation7 + $0x1cc] sm:$0xff]
        %v390 = vld [vmem:[#allocation7 + $0x1d4] sm:$0xff]
        %v391 = vld [vmem:[#allocation7 + $0x1dc] sm:$0xf]
        %v392 = vld [vmem:[#allocation7 + $0x1e0] sm:$0xff]
        %v393 = vld [vmem:[#allocation7 + $0x1e8] sm:$0xff]
        %v394 = vld [vmem:[#allocation7 + $0x1f0] sm:$0xf]
        %v395 = vld [vmem:[#allocation7 + $0x1f4] sm:$0xff]
        %v396 = vld [vmem:[#allocation7 + $0x1fc] sm:$0xff]
        %v397 = vld [vmem:[#allocation7 + $0x204] sm:$0xf]
        %v398 = vld [vmem:[#allocation7 + $0x208] sm:$0xff]
        %v399 = vld [vmem:[#allocation7 + $0x210] sm:$0xff]
        %v400 = vld [vmem:[#allocation7 + $0x218] sm:$0xf]
        %v401 = vld [vmem:[#allocation7 + $0x21c] sm:$0xff]
        %v402 = vld [vmem:[#allocation7 + $0x224] sm:$0xff]
        %v403 = vld [vmem:[#allocation7 + $0x22c] sm:$0xf]
        %v404 = vld [vmem:[#allocation7 + $0x230] sm:$0xff]
        %v405 = vld [vmem:[#allocation7 + $0x238] sm:$0xff]
        %v406 = vld [vmem:[#allocation7 + $0x240] sm:$0xf]
        %v407 = vld [vmem:[#allocation7 + $0x244] sm:$0xff]
        %v408 = vld [vmem:[#allocation7 + $0x24c] sm:$0xff]
        %v409 = vld [vmem:[#allocation7 + $0x254] sm:$0xf]
        %v410 = vld [vmem:[#allocation7 + $0x258] sm:$0xff]
        %v411 = vld [vmem:[#allocation7 + $0x260] sm:$0xff]
        %v412 = vld [vmem:[#allocation7 + $0x268] sm:$0xf]
        %v413 = vld [vmem:[#allocation7 + $0x26c] sm:$0xff]
        %v414 = vld [vmem:[#allocation7 + $0x274] sm:$0xff]
        %v415 = vld [vmem:[#allocation7 + $0x27c] sm:$0xf]
        %v416 = vld [vmem:[#allocation7 + $0x280] sm:$0xff]
        %v417 = vld [vmem:[#allocation7 + $0x288] sm:$0xff]
        %v418 = vld [vmem:[#allocation7 + $0x290] sm:$0xf]
        %v419 = vld [vmem:[#allocation7 + $0x294] sm:$0xff]
        %v420 = vld [vmem:[#allocation7 + $0x29c] sm:$0xff]
        %v421 = vld [vmem:[#allocation7 + $0x2a4] sm:$0xf]
        %v422 = vld [vmem:[#allocation7 + $0x2a8] sm:$0xff]
        %v423 = vld [vmem:[#allocation7 + $0x2b0] sm:$0xff]
        %v424 = vld [vmem:[#allocation7 + $0x2b8] sm:$0xf]
        %v425 = vld [vmem:[#allocation7 + $0x2bc] sm:$0xff]
        %v426 = vld [vmem:[#allocation7 + $0x2c4] sm:$0xff]
        %v427 = vld [vmem:[#allocation7 + $0x2cc] sm:$0xf]
        %v428 = vld [vmem:[#allocation7 + $0x2d0] sm:$0xff]
        %v429 = vld [vmem:[#allocation7 + $0x2d8] sm:$0xff]
        %v430 = vld [vmem:[#allocation7 + $0x2e0] sm:$0xf]
        %v431 = vld [vmem:[#allocation7 + $0x2e4] sm:$0xff]
        %v432 = vld [vmem:[#allocation7 + $0x2ec] sm:$0xff]
        %v433 = vld [vmem:[#allocation7 + $0x2f4] sm:$0xf]
        %v434 = vld [vmem:[#allocation7 + $0x2f8] sm:$0xff]
        %v435 = vld [vmem:[#allocation7 + $0x300] sm:$0xff]
        %v436 = vld [vmem:[#allocation7 + $0x308] sm:$0xf]
        %v437 = vld [vmem:[#allocation7 + $0x30c] sm:$0xff]
        %v438 = vld [vmem:[#allocation7 + $0x314] sm:$0xff]
        %v439 = vld [vmem:[#allocation7 + $0x31c] sm:$0xf]
        %v440 = vld [vmem:[#allocation7 + $0x320] sm:$0xff]
        %v441 = vld [vmem:[#allocation7 + $0x328] sm:$0xff]
        %v442 = vld [vmem:[#allocation7 + $0x330] sm:$0xf]
        %v443 = vld [vmem:[#allocation7 + $0x334] sm:$0xff]
        %v444 = vld [vmem:[#allocation7 + $0x33c] sm:$0xff]
        %v445 = vld [vmem:[#allocation7 + $0x344] sm:$0xf]
        %v446 = vld [vmem:[#allocation7 + $0x348] sm:$0xff]
        %v447 = vld [vmem:[#allocation7 + $0x350] sm:$0xff]
        %v448 = vld [vmem:[#allocation7 + $0x358] sm:$0xf]
        %v449 = vld [vmem:[#allocation7 + $0x35c] sm:$0xff]
        %v450 = vld [vmem:[#allocation7 + $0x364] sm:$0xff]
        %v451 = vld [vmem:[#allocation7 + $0x36c] sm:$0xf]
        %v452 = vld [vmem:[#allocation7 + $0x370] sm:$0xff]
        %v453 = vld [vmem:[#allocation7 + $0x378] sm:$0xff]
        %v454 = vld [vmem:[#allocation7 + $0x380] sm:$0xf]
        %v455 = vld [vmem:[#allocation7 + $0x384] sm:$0xff]
        %v456 = vld [vmem:[#allocation7 + $0x38c] sm:$0xff]
        %v457 = vld [vmem:[#allocation7 + $0x394] sm:$0xf]
        %v458 = vld [vmem:[#allocation7 + $0x398] sm:$0xff]
        %v459 = vld [vmem:[#allocation7 + $0x3a0] sm:$0xff]
        %v460 = vld [vmem:[#allocation7 + $0x3a8] sm:$0xf]
        %v461 = vld [vmem:[#allocation7 + $0x3ac] sm:$0xff]
        %v462 = vld [vmem:[#allocation7 + $0x3b4] sm:$0xff]
        %v463 = vld [vmem:[#allocation7 + $0x3bc] sm:$0xf]
        %v464 = vld [vmem:[#allocation7 + $0x3c0] sm:$0xff]
        %v465 = vld [vmem:[#allocation7 + $0x3c8] sm:$0xff]
        %v466 = vld [vmem:[#allocation7 + $0x3d0] sm:$0xf]
        %v467 = vld [vmem:[#allocation7 + $0x3d4] sm:$0xff]
        %v468 = vld [vmem:[#allocation7 + $0x3dc] sm:$0xff]
        %v469 = vld [vmem:[#allocation7 + $0x3e4] sm:$0xf]
        %v470 = vld [vmem:[#allocation7 + $0x3e8] sm:$0xff]
        %v471 = vld [vmem:[#allocation7 + $0x3f0] sm:$0xff]
        %v472 = vld [vmem:[#allocation7 + $0x3f8] sm:$0xf]
        %v473 = vld [vmem:[#allocation7 + $0x3fc] sm:$0xff]
        %v474 = vld [vmem:[#allocation7 + $0x404] sm:$0xff]
        %v475 = vld [vmem:[#allocation7 + $0x40c] sm:$0xf]
        %v476 = vld [vmem:[#allocation7 + $0x410] sm:$0xff]
        %v477 = vld [vmem:[#allocation7 + $0x418] sm:$0xff]
        %v478 = vld [vmem:[#allocation7 + $0x420] sm:$0xf]
        %v479 = vld [vmem:[#allocation7 + $0x424] sm:$0xff]
        %v480 = vld [vmem:[#allocation7 + $0x42c] sm:$0xff]
        %v481 = vld [vmem:[#allocation7 + $0x434] sm:$0xf]
        %v482 = vld [vmem:[#allocation7 + $0x438] sm:$0xff]
        %v483 = vld [vmem:[#allocation7 + $0x440] sm:$0xff]
        %v484 = vld [vmem:[#allocation7 + $0x448] sm:$0xf]
        %v485 = vld [vmem:[#allocation7 + $0x44c] sm:$0xff]
        %v486 = vld [vmem:[#allocation7 + $0x454] sm:$0xff]
        %v487 = vld [vmem:[#allocation7 + $0x45c] sm:$0xf]
        %v488 = vld [vmem:[#allocation7 + $0x460] sm:$0xff]
        %v489 = vld [vmem:[#allocation7 + $0x468] sm:$0xff]
        %v490 = vld [vmem:[#allocation7 + $0x470] sm:$0xf]
        %v491 = vld [vmem:[#allocation7 + $0x474] sm:$0xff]
        %v492 = vld [vmem:[#allocation7 + $0x47c] sm:$0xff]
        %v493 = vld [vmem:[#allocation7 + $0x484] sm:$0xf]
        %v494 = vld [vmem:[#allocation7 + $0x488] sm:$0xff]
        %v495 = vld [vmem:[#allocation7 + $0x490] sm:$0xff]
        %v496 = vld [vmem:[#allocation7 + $0x498] sm:$0xf]
        %v497 = vld [vmem:[#allocation7 + $0x49c] sm:$0xff]
        %v498 = vld [vmem:[#allocation7 + $0x4a4] sm:$0xff]
        %v499 = vld [vmem:[#allocation7 + $0x4ac] sm:$0xf]
        %v500 = vld [vmem:[#allocation7 + $0x4b0] sm:$0xff]
        %v501 = vld [vmem:[#allocation7 + $0x4b8] sm:$0xff]
        %v502 = vld [vmem:[#allocation7 + $0x4c0] sm:$0xf]
        %v503 = vld [vmem:[#allocation7 + $0x4c4] sm:$0xff]
        %v504 = vld [vmem:[#allocation7 + $0x4cc] sm:$0xff]
        %v505 = vld [vmem:[#allocation7 + $0x4d4] sm:$0xf]
        %v506 = vld [vmem:[#allocation7 + $0x4d8] sm:$0xff]
        %v507 = vld [vmem:[#allocation7 + $0x4e0] sm:$0xff]
        %v508 = vld [vmem:[#allocation7 + $0x4e8] sm:$0xf]
        %v509 = vld [vmem:[#allocation7 + $0x4ec] sm:$0xff]
        %v510 = vld [vmem:[#allocation7 + $0x4f4] sm:$0xff]
        %v511 = vld [vmem:[#allocation7 + $0x4fc] sm:$0xf]
        %v704 = vunpack.c.l.b16 %v320
        %v705 = vunpack.c.h.b16 %v320
        %v706 = vunpack.c.l.b16 %v321
        %v707 = vunpack.c.h.b16 %v321
        %v708 = vunpack.c.l.b16 %v322
        %v709 = vunpack.c.l.b16 %v323
        %v710 = vunpack.c.h.b16 %v323
        %v711 = vunpack.c.l.b16 %v324
        %v712 = vunpack.c.h.b16 %v324
        %v713 = vunpack.c.l.b16 %v325
        %v714 = vunpack.c.l.b16 %v326
        %v715 = vunpack.c.h.b16 %v326
        %v716 = vunpack.c.l.b16 %v327
        %v717 = vunpack.c.h.b16 %v327
        %v718 = vunpack.c.l.b16 %v328
        %v719 = vunpack.c.l.b16 %v329
        %v720 = vunpack.c.h.b16 %v329
        %v721 = vunpack.c.l.b16 %v330
        %v722 = vunpack.c.h.b16 %v330
        %v723 = vunpack.c.l.b16 %v331
        %v724 = vunpack.c.l.b16 %v332
        %v725 = vunpack.c.h.b16 %v332
        %v726 = vunpack.c.l.b16 %v333
        %v727 = vunpack.c.h.b16 %v333
        %v728 = vunpack.c.l.b16 %v334
        %v729 = vunpack.c.l.b16 %v335
        %v730 = vunpack.c.h.b16 %v335
        %v731 = vunpack.c.l.b16 %v336
        %v732 = vunpack.c.h.b16 %v336
        %v733 = vunpack.c.l.b16 %v337
        %v734 = vunpack.c.l.b16 %v338
        %v735 = vunpack.c.h.b16 %v338
        %v736 = vunpack.c.l.b16 %v339
        %v737 = vunpack.c.h.b16 %v339
        %v738 = vunpack.c.l.b16 %v340
        %v739 = vunpack.c.l.b16 %v341
        %v740 = vunpack.c.h.b16 %v341
        %v741 = vunpack.c.l.b16 %v342
        %v742 = vunpack.c.h.b16 %v342
        %v743 = vunpack.c.l.b16 %v343
        %v744 = vunpack.c.l.b16 %v344
        %v745 = vunpack.c.h.b16 %v344
        %v746 = vunpack.c.l.b16 %v345
        %v747 = vunpack.c.h.b16 %v345
        %v748 = vunpack.c.l.b16 %v346
        %v749 = vunpack.c.l.b16 %v347
        %v750 = vunpack.c.h.b16 %v347
        %v751 = vunpack.c.l.b16 %v348
        %v752 = vunpack.c.h.b16 %v348
        %v753 = vunpack.c.l.b16 %v349
        %v754 = vunpack.c.l.b16 %v350
        %v755 = vunpack.c.h.b16 %v350
        %v756 = vunpack.c.l.b16 %v351
        %v757 = vunpack.c.h.b16 %v351
        %v758 = vunpack.c.l.b16 %v352
        %v759 = vunpack.c.l.b16 %v353
        %v760 = vunpack.c.h.b16 %v353
        %v761 = vunpack.c.l.b16 %v354
        %v762 = vunpack.c.h.b16 %v354
        %v763 = vunpack.c.l.b16 %v355
        %v764 = vunpack.c.l.b16 %v356
        %v765 = vunpack.c.h.b16 %v356
        %v766 = vunpack.c.l.b16 %v357
        %v767 = vunpack.c.h.b16 %v357
        %v768 = vunpack.c.l.b16 %v358
        %v769 = vunpack.c.l.b16 %v359
        %v770 = vunpack.c.h.b16 %v359
        %v771 = vunpack.c.l.b16 %v360
        %v772 = vunpack.c.h.b16 %v360
        %v773 = vunpack.c.l.b16 %v361
        %v774 = vunpack.c.l.b16 %v362
        %v775 = vunpack.c.h.b16 %v362
        %v776 = vunpack.c.l.b16 %v363
        %v777 = vunpack.c.h.b16 %v363
        %v778 = vunpack.c.l.b16 %v364
        %v779 = vunpack.c.l.b16 %v365
        %v780 = vunpack.c.h.b16 %v365
        %v781 = vunpack.c.l.b16 %v366
        %v782 = vunpack.c.h.b16 %v366
        %v783 = vunpack.c.l.b16 %v367
        %v784 = vunpack.c.l.b16 %v368
        %v785 = vunpack.c.h.b16 %v368
        %v786 = vunpack.c.l.b16 %v369
        %v787 = vunpack.c.h.b16 %v369
        %v788 = vunpack.c.l.b16 %v370
        %v789 = vunpack.c.l.b16 %v371
        %v790 = vunpack.c.h.b16 %v371
        %v791 = vunpack.c.l.b16 %v372
        %v792 = vunpack.c.h.b16 %v372
        %v793 = vunpack.c.l.b16 %v373
        %v794 = vunpack.c.l.b16 %v374
        %v795 = vunpack.c.h.b16 %v374
        %v796 = vunpack.c.l.b16 %v375
        %v797 = vunpack.c.h.b16 %v375
        %v798 = vunpack.c.l.b16 %v376
        %v799 = vunpack.c.l.b16 %v377
        %v800 = vunpack.c.h.b16 %v377
        %v801 = vunpack.c.l.b16 %v378
        %v802 = vunpack.c.h.b16 %v378
        %v803 = vunpack.c.l.b16 %v379
        %v804 = vunpack.c.l.b16 %v380
        %v805 = vunpack.c.h.b16 %v380
        %v806 = vunpack.c.l.b16 %v381
        %v807 = vunpack.c.h.b16 %v381
        %v808 = vunpack.c.l.b16 %v382
        %v809 = vunpack.c.l.b16 %v383
        %v810 = vunpack.c.h.b16 %v383
        %v811 = vunpack.c.l.b16 %v384
        %v812 = vunpack.c.h.b16 %v384
        %v813 = vunpack.c.l.b16 %v385
        %v814 = vunpack.c.l.b16 %v386
        %v815 = vunpack.c.h.b16 %v386
        %v816 = vunpack.c.l.b16 %v387
        %v817 = vunpack.c.h.b16 %v387
        %v818 = vunpack.c.l.b16 %v388
        %v819 = vunpack.c.l.b16 %v389
        %v820 = vunpack.c.h.b16 %v389
        %v821 = vunpack.c.l.b16 %v390
        %v822 = vunpack.c.h.b16 %v390
        %v823 = vunpack.c.l.b16 %v391
        %v824 = vunpack.c.l.b16 %v392
        %v825 = vunpack.c.h.b16 %v392
        %v826 = vunpack.c.l.b16 %v393
        %v827 = vunpack.c.h.b16 %v393
        %v828 = vunpack.c.l.b16 %v394
        %v829 = vunpack.c.l.b16 %v395
        %v830 = vunpack.c.h.b16 %v395
        %v831 = vunpack.c.l.b16 %v396
        %v832 = vunpack.c.h.b16 %v396
        %v833 = vunpack.c.l.b16 %v397
        %v834 = vunpack.c.l.b16 %v398
        %v835 = vunpack.c.h.b16 %v398
        %v836 = vunpack.c.l.b16 %v399
        %v837 = vunpack.c.h.b16 %v399
        %v838 = vunpack.c.l.b16 %v400
        %v839 = vunpack.c.l.b16 %v401
        %v840 = vunpack.c.h.b16 %v401
        %v841 = vunpack.c.l.b16 %v402
        %v842 = vunpack.c.h.b16 %v402
        %v843 = vunpack.c.l.b16 %v403
        %v844 = vunpack.c.l.b16 %v404
        %v845 = vunpack.c.h.b16 %v404
        %v846 = vunpack.c.l.b16 %v405
        %v847 = vunpack.c.h.b16 %v405
        %v848 = vunpack.c.l.b16 %v406
        %v849 = vunpack.c.l.b16 %v407
        %v850 = vunpack.c.h.b16 %v407
        %v851 = vunpack.c.l.b16 %v408
        %v852 = vunpack.c.h.b16 %v408
        %v853 = vunpack.c.l.b16 %v409
        %v854 = vunpack.c.l.b16 %v410
        %v855 = vunpack.c.h.b16 %v410
        %v856 = vunpack.c.l.b16 %v411
        %v857 = vunpack.c.h.b16 %v411
        %v858 = vunpack.c.l.b16 %v412
        %v859 = vunpack.c.l.b16 %v413
        %v860 = vunpack.c.h.b16 %v413
        %v861 = vunpack.c.l.b16 %v414
        %v862 = vunpack.c.h.b16 %v414
        %v863 = vunpack.c.l.b16 %v415
        %v864 = vunpack.c.l.b16 %v416
        %v865 = vunpack.c.h.b16 %v416
        %v866 = vunpack.c.l.b16 %v417
        %v867 = vunpack.c.h.b16 %v417
        %v868 = vunpack.c.l.b16 %v418
        %v869 = vunpack.c.l.b16 %v419
        %v870 = vunpack.c.h.b16 %v419
        %v871 = vunpack.c.l.b16 %v420
        %v872 = vunpack.c.h.b16 %v420
        %v873 = vunpack.c.l.b16 %v421
        %v874 = vunpack.c.l.b16 %v422
        %v875 = vunpack.c.h.b16 %v422
        %v876 = vunpack.c.l.b16 %v423
        %v877 = vunpack.c.h.b16 %v423
        %v878 = vunpack.c.l.b16 %v424
        %v879 = vunpack.c.l.b16 %v425
        %v880 = vunpack.c.h.b16 %v425
        %v881 = vunpack.c.l.b16 %v426
        %v882 = vunpack.c.h.b16 %v426
        %v883 = vunpack.c.l.b16 %v427
        %v884 = vunpack.c.l.b16 %v428
        %v885 = vunpack.c.h.b16 %v428
        %v886 = vunpack.c.l.b16 %v429
        %v887 = vunpack.c.h.b16 %v429
        %v888 = vunpack.c.l.b16 %v430
        %v889 = vunpack.c.l.b16 %v431
        %v890 = vunpack.c.h.b16 %v431
        %v891 = vunpack.c.l.b16 %v432
        %v892 = vunpack.c.h.b16 %v432
        %v893 = vunpack.c.l.b16 %v433
        %v894 = vunpack.c.l.b16 %v434
        %v895 = vunpack.c.h.b16 %v434
        %v896 = vunpack.c.l.b16 %v435
        %v897 = vunpack.c.h.b16 %v435
        %v898 = vunpack.c.l.b16 %v436
        %v899 = vunpack.c.l.b16 %v437
        %v900 = vunpack.c.h.b16 %v437
        %v901 = vunpack.c.l.b16 %v438
        %v902 = vunpack.c.h.b16 %v438
        %v903 = vunpack.c.l.b16 %v439
        %v904 = vunpack.c.l.b16 %v440
        %v905 = vunpack.c.h.b16 %v440
        %v906 = vunpack.c.l.b16 %v441
        %v907 = vunpack.c.h.b16 %v441
        %v908 = vunpack.c.l.b16 %v442
        %v909 = vunpack.c.l.b16 %v443
        %v910 = vunpack.c.h.b16 %v443
        %v911 = vunpack.c.l.b16 %v444
        %v912 = vunpack.c.h.b16 %v444
        %v913 = vunpack.c.l.b16 %v445
        %v914 = vunpack.c.l.b16 %v446
        %v915 = vunpack.c.h.b16 %v446
        %v916 = vunpack.c.l.b16 %v447
        %v917 = vunpack.c.h.b16 %v447
        %v918 = vunpack.c.l.b16 %v448
        %v919 = vunpack.c.l.b16 %v449
        %v920 = vunpack.c.h.b16 %v449
        %v921 = vunpack.c.l.b16 %v450
        %v922 = vunpack.c.h.b16 %v450
        %v923 = vunpack.c.l.b16 %v451
        %v924 = vunpack.c.l.b16 %v452
        %v925 = vunpack.c.h.b16 %v452
        %v926 = vunpack.c.l.b16 %v453
        %v927 = vunpack.c.h.b16 %v453
        %v928 = vunpack.c.l.b16 %v454
        %v929 = vunpack.c.l.b16 %v455
        %v930 = vunpack.c.h.b16 %v455
        %v931 = vunpack.c.l.b16 %v456
        %v932 = vunpack.c.h.b16 %v456
        %v933 = vunpack.c.l.b16 %v457
        %v934 = vunpack.c.l.b16 %v458
        %v935 = vunpack.c.h.b16 %v458
        %v936 = vunpack.c.l.b16 %v459
        %v937 = vunpack.c.h.b16 %v459
        %v938 = vunpack.c.l.b16 %v460
        %v939 = vunpack.c.l.b16 %v461
        %v940 = vunpack.c.h.b16 %v461
        %v941 = vunpack.c.l.b16 %v462
        %v942 = vunpack.c.h.b16 %v462
        %v943 = vunpack.c.l.b16 %v463
        %v944 = vunpack.c.l.b16 %v464
        %v945 = vunpack.c.h.b16 %v464
        %v946 = vunpack.c.l.b16 %v465
        %v947 = vunpack.c.h.b16 %v465
        %v948 = vunpack.c.l.b16 %v466
        %v949 = vunpack.c.l.b16 %v467
        %v950 = vunpack.c.h.b16 %v467
        %v951 = vunpack.c.l.b16 %v468
        %v952 = vunpack.c.h.b16 %v468
        %v953 = vunpack.c.l.b16 %v469
        %v954 = vunpack.c.l.b16 %v470
        %v955 = vunpack.c.h.b16 %v470
        %v956 = vunpack.c.l.b16 %v471
        %v957 = vunpack.c.h.b16 %v471
        %v958 = vunpack.c.l.b16 %v472
        %v959 = vunpack.c.l.b16 %v473
        %v960 = vunpack.c.h.b16 %v473
        %v961 = vunpack.c.l.b16 %v474
        %v962 = vunpack.c.h.b16 %v474
        %v963 = vunpack.c.l.b16 %v475
        %v964 = vunpack.c.l.b16 %v476
        %v965 = vunpack.c.h.b16 %v476
        %v966 = vunpack.c.l.b16 %v477
        %v967 = vunpack.c.h.b16 %v477
        %v968 = vunpack.c.l.b16 %v478
        %v969 = vunpack.c.l.b16 %v479
        %v970 = vunpack.c.h.b16 %v479
        %v971 = vunpack.c.l.b16 %v480
        %v972 = vunpack.c.h.b16 %v480
        %v973 = vunpack.c.l.b16 %v481
        %v974 = vunpack.c.l.b16 %v482
        %v975 = vunpack.c.h.b16 %v482
        %v976 = vunpack.c.l.b16 %v483
        %v977 = vunpack.c.h.b16 %v483
        %v978 = vunpack.c.l.b16 %v484
        %v979 = vunpack.c.l.b16 %v485
        %v980 = vunpack.c.h.b16 %v485
        %v981 = vunpack.c.l.b16 %v486
        %v982 = vunpack.c.h.b16 %v486
        %v983 = vunpack.c.l.b16 %v487
        %v984 = vunpack.c.l.b16 %v488
        %v985 = vunpack.c.h.b16 %v488
        %v986 = vunpack.c.l.b16 %v489
        %v987 = vunpack.c.h.b16 %v489
        %v988 = vunpack.c.l.b16 %v490
        %v989 = vunpack.c.l.b16 %v491
        %v990 = vunpack.c.h.b16 %v491
        %v991 = vunpack.c.l.b16 %v492
        %v992 = vunpack.c.h.b16 %v492
        %v993 = vunpack.c.l.b16 %v493
        %v994 = vunpack.c.l.b16 %v494
        %v995 = vunpack.c.h.b16 %v494
        %v996 = vunpack.c.l.b16 %v495
        %v997 = vunpack.c.h.b16 %v495
        %v998 = vunpack.c.l.b16 %v496
        %v999 = vunpack.c.l.b16 %v497
        %v1000 = vunpack.c.h.b16 %v497
        %v1001 = vunpack.c.l.b16 %v498
        %v1002 = vunpack.c.h.b16 %v498
        %v1003 = vunpack.c.l.b16 %v499
        %v1004 = vunpack.c.l.b16 %v500
        %v1005 = vunpack.c.h.b16 %v500
        %v1006 = vunpack.c.l.b16 %v501
        %v1007 = vunpack.c.h.b16 %v501
        %v1008 = vunpack.c.l.b16 %v502
        %v1009 = vunpack.c.l.b16 %v503
        %v1010 = vunpack.c.h.b16 %v503
        %v1011 = vunpack.c.l.b16 %v504
        %v1012 = vunpack.c.h.b16 %v504
        %v1013 = vunpack.c.l.b16 %v505
        %v1014 = vunpack.c.l.b16 %v506
        %v1015 = vunpack.c.h.b16 %v506
        %v1016 = vunpack.c.l.b16 %v507
        %v1017 = vunpack.c.h.b16 %v507
        %v1018 = vunpack.c.l.b16 %v508
        %v1019 = vunpack.c.l.b16 %v509
        %v1020 = vunpack.c.h.b16 %v509
        %v1021 = vunpack.c.l.b16 %v510
        %v1022 = vunpack.c.h.b16 %v510
        %v1023 = vunpack.c.l.b16 %v511
        %v1024 = vpack.c.b16 %v709, %v704
        %v1025 = vpack.c.b16 %v710, %v705
        %v1026 = vpack.c.b16 %v711, %v706
        %v1027 = vpack.c.b16 %v712, %v707
        %v1028 = vpack.c.b16 %v713, %v708
        %v1029 = vpack.c.b16 %v719, %v714
        %v1030 = vpack.c.b16 %v720, %v715
        %v1031 = vpack.c.b16 %v721, %v716
        %v1032 = vpack.c.b16 %v722, %v717
        %v1033 = vpack.c.b16 %v723, %v718
        %v1034 = vpack.c.b16 %v729, %v724
        %v1035 = vpack.c.b16 %v730, %v725
        %v1036 = vpack.c.b16 %v731, %v726
        %v1037 = vpack.c.b16 %v732, %v727
        %v1038 = vpack.c.b16 %v733, %v728
        %v1039 = vpack.c.b16 %v739, %v734
        %v1040 = vpack.c.b16 %v740, %v735
        %v1041 = vpack.c.b16 %v741, %v736
        %v1042 = vpack.c.b16 %v742, %v737
        %v1043 = vpack.c.b16 %v743, %v738
        %v1044 = vpack.c.b16 %v749, %v744
        %v1045 = vpack.c.b16 %v750, %v745
        %v1046 = vpack.c.b16 %v751, %v746
        %v1047 = vpack.c.b16 %v752, %v747
        %v1048 = vpack.c.b16 %v753, %v748
        %v1049 = vpack.c.b16 %v759, %v754
        %v1050 = vpack.c.b16 %v760, %v755
        %v1051 = vpack.c.b16 %v761, %v756
        %v1052 = vpack.c.b16 %v762, %v757
        %v1053 = vpack.c.b16 %v763, %v758
        %v1054 = vpack.c.b16 %v769, %v764
        %v1055 = vpack.c.b16 %v770, %v765
        %v1056 = vpack.c.b16 %v771, %v766
        %v1057 = vpack.c.b16 %v772, %v767
        %v1058 = vpack.c.b16 %v773, %v768
        %v1059 = vpack.c.b16 %v779, %v774
        %v1060 = vpack.c.b16 %v780, %v775
        %v1061 = vpack.c.b16 %v781, %v776
        %v1062 = vpack.c.b16 %v782, %v777
        %v1063 = vpack.c.b16 %v783, %v778
        %v1064 = vpack.c.b16 %v789, %v784
        %v1065 = vpack.c.b16 %v790, %v785
        %v1066 = vpack.c.b16 %v791, %v786
        %v1067 = vpack.c.b16 %v792, %v787
        %v1068 = vpack.c.b16 %v793, %v788
        %v1069 = vpack.c.b16 %v799, %v794
        %v1070 = vpack.c.b16 %v800, %v795
        %v1071 = vpack.c.b16 %v801, %v796
        %v1072 = vpack.c.b16 %v802, %v797
        %v1073 = vpack.c.b16 %v803, %v798
        %v1074 = vpack.c.b16 %v809, %v804
        %v1075 = vpack.c.b16 %v810, %v805
        %v1076 = vpack.c.b16 %v811, %v806
        %v1077 = vpack.c.b16 %v812, %v807
        %v1078 = vpack.c.b16 %v813, %v808
        %v1079 = vpack.c.b16 %v819, %v814
        %v1080 = vpack.c.b16 %v820, %v815
        %v1081 = vpack.c.b16 %v821, %v816
        %v1082 = vpack.c.b16 %v822, %v817
        %v1083 = vpack.c.b16 %v823, %v818
        %v1084 = vpack.c.b16 %v829, %v824
        %v1085 = vpack.c.b16 %v830, %v825
        %v1086 = vpack.c.b16 %v831, %v826
        %v1087 = vpack.c.b16 %v832, %v827
        %v1088 = vpack.c.b16 %v833, %v828
        %v1089 = vpack.c.b16 %v839, %v834
        %v1090 = vpack.c.b16 %v840, %v835
        %v1091 = vpack.c.b16 %v841, %v836
        %v1092 = vpack.c.b16 %v842, %v837
        %v1093 = vpack.c.b16 %v843, %v838
        %v1094 = vpack.c.b16 %v849, %v844
        %v1095 = vpack.c.b16 %v850, %v845
        %v1096 = vpack.c.b16 %v851, %v846
        %v1097 = vpack.c.b16 %v852, %v847
        %v1098 = vpack.c.b16 %v853, %v848
        %v1099 = vpack.c.b16 %v859, %v854
        %v1100 = vpack.c.b16 %v860, %v855
        %v1101 = vpack.c.b16 %v861, %v856
        %v1102 = vpack.c.b16 %v862, %v857
        %v1103 = vpack.c.b16 %v863, %v858
        %v1104 = vpack.c.b16 %v869, %v864
        %v1105 = vpack.c.b16 %v870, %v865
        %v1106 = vpack.c.b16 %v871, %v866
        %v1107 = vpack.c.b16 %v872, %v867
        %v1108 = vpack.c.b16 %v873, %v868
        %v1109 = vpack.c.b16 %v879, %v874
        %v1110 = vpack.c.b16 %v880, %v875
        %v1111 = vpack.c.b16 %v881, %v876
        %v1112 = vpack.c.b16 %v882, %v877
        %v1113 = vpack.c.b16 %v883, %v878
        %v1114 = vpack.c.b16 %v889, %v884
        %v1115 = vpack.c.b16 %v890, %v885
        %v1116 = vpack.c.b16 %v891, %v886
        %v1117 = vpack.c.b16 %v892, %v887
        %v1118 = vpack.c.b16 %v893, %v888
        %v1119 = vpack.c.b16 %v899, %v894
        %v1120 = vpack.c.b16 %v900, %v895
        %v1121 = vpack.c.b16 %v901, %v896
        %v1122 = vpack.c.b16 %v902, %v897
        %v1123 = vpack.c.b16 %v903, %v898
        %v1124 = vpack.c.b16 %v909, %v904
        %v1125 = vpack.c.b16 %v910, %v905
        %v1126 = vpack.c.b16 %v911, %v906
        %v1127 = vpack.c.b16 %v912, %v907
        %v1128 = vpack.c.b16 %v913, %v908
        %v1129 = vpack.c.b16 %v919, %v914
        %v1130 = vpack.c.b16 %v920, %v915
        %v1131 = vpack.c.b16 %v921, %v916
        %v1132 = vpack.c.b16 %v922, %v917
        %v1133 = vpack.c.b16 %v923, %v918
        %v1134 = vpack.c.b16 %v929, %v924
        %v1135 = vpack.c.b16 %v930, %v925
        %v1136 = vpack.c.b16 %v931, %v926
        %v1137 = vpack.c.b16 %v932, %v927
        %v1138 = vpack.c.b16 %v933, %v928
        %v1139 = vpack.c.b16 %v939, %v934
        %v1140 = vpack.c.b16 %v940, %v935
        %v1141 = vpack.c.b16 %v941, %v936
        %v1142 = vpack.c.b16 %v942, %v937
        %v1143 = vpack.c.b16 %v943, %v938
        %v1144 = vpack.c.b16 %v949, %v944
        %v1145 = vpack.c.b16 %v950, %v945
        %v1146 = vpack.c.b16 %v951, %v946
        %v1147 = vpack.c.b16 %v952, %v947
        %v1148 = vpack.c.b16 %v953, %v948
        %v1149 = vpack.c.b16 %v959, %v954
        %v1150 = vpack.c.b16 %v960, %v955
        %v1151 = vpack.c.b16 %v961, %v956
        %v1152 = vpack.c.b16 %v962, %v957
        %v1153 = vpack.c.b16 %v963, %v958
        %v1154 = vpack.c.b16 %v969, %v964
        %v1155 = vpack.c.b16 %v970, %v965
        %v1156 = vpack.c.b16 %v971, %v966
        %v1157 = vpack.c.b16 %v972, %v967
        %v1158 = vpack.c.b16 %v973, %v968
        %v1159 = vpack.c.b16 %v979, %v974
        %v1160 = vpack.c.b16 %v980, %v975
        %v1161 = vpack.c.b16 %v981, %v976
        %v1162 = vpack.c.b16 %v982, %v977
        %v1163 = vpack.c.b16 %v983, %v978
        %v1164 = vpack.c.b16 %v989, %v984
        %v1165 = vpack.c.b16 %v990, %v985
        %v1166 = vpack.c.b16 %v991, %v986
        %v1167 = vpack.c.b16 %v992, %v987
        %v1168 = vpack.c.b16 %v993, %v988
        %v1169 = vpack.c.b16 %v999, %v994
        %v1170 = vpack.c.b16 %v1000, %v995
        %v1171 = vpack.c.b16 %v1001, %v996
        %v1172 = vpack.c.b16 %v1002, %v997
        %v1173 = vpack.c.b16 %v1003, %v998
        %v1174 = vpack.c.b16 %v1009, %v1004
        %v1175 = vpack.c.b16 %v1010, %v1005
        %v1176 = vpack.c.b16 %v1011, %v1006
        %v1177 = vpack.c.b16 %v1012, %v1007
        %v1178 = vpack.c.b16 %v1013, %v1008
        %v1179 = vpack.c.b16 %v1019, %v1014
        %v1180 = vpack.c.b16 %v1020, %v1015
        %v1181 = vpack.c.b16 %v1021, %v1016
        %v1182 = vpack.c.b16 %v1022, %v1017
        %v1183 = vpack.c.b16 %v1023, %v1018
        %1344 = vmatprep.subr.bf16.mxu0 %v1025
        %1345 = vmatpush1.bf16.msra.mxu0 %v1024
        %1346 = vmatprep.subr.bf16.mxu0 %v1030
        %1347 = vmatpush1.bf16.msra.mxu0 %v1029
        %1348 = vmatprep.subr.bf16.mxu0 %v1035
        %1349 = vmatpush1.bf16.msra.mxu0 %v1034
        %1350 = vmatprep.subr.bf16.mxu0 %v1040
        %1351 = vmatpush1.bf16.msra.mxu0 %v1039
        %1352 = vmatprep.subr.bf16.mxu0 %v1045
        %1353 = vmatpush1.bf16.msra.mxu0 %v1044
        %1354 = vmatprep.subr.bf16.mxu0 %v1050
        %1355 = vmatpush1.bf16.msra.mxu0 %v1049
        %1356 = vmatprep.subr.bf16.mxu0 %v1055
        %1357 = vmatpush1.bf16.msra.mxu0 %v1054
        %1358 = vmatprep.subr.bf16.mxu0 %v1060
        %1359 = vmatpush1.bf16.msra.mxu0 %v1059
        %1360 = vmatprep.subr.bf16.mxu0 %v1065
        %1361 = vmatpush1.bf16.msra.mxu0 %v1064
        %1362 = vmatprep.subr.bf16.mxu0 %v1070
        %1363 = vmatpush1.bf16.msra.mxu0 %v1069
        %1364 = vmatprep.subr.bf16.mxu0 %v1075
        %1365 = vmatpush1.bf16.msra.mxu0 %v1074
        %1366 = vmatprep.subr.bf16.mxu0 %v1080
        %1367 = vmatpush1.bf16.msra.mxu0 %v1079
        %1368 = vmatprep.subr.bf16.mxu0 %v1085
        %1369 = vmatpush1.bf16.msra.mxu0 %v1084
        %1370 = vmatprep.subr.bf16.mxu0 %v1090
        %1371 = vmatpush1.bf16.msra.mxu0 %v1089
        %1372 = vmatprep.subr.bf16.mxu0 %v1095
        %1373 = vmatpush1.bf16.msra.mxu0 %v1094
        %1374 = vmatprep.subr.bf16.mxu0 %v1100
        %1375 = vmatpush1.bf16.msra.mxu0 %v1099
        %1376 = vmatprep.mubr.bf16.mxu0 %v300
        %1377 = vmatmul.mubr.bf16.gmra.mrb[0].mxu0 %v286
        %v1378 = vpop.f32.mrb[0].mxu0
        %v1379 = vadd.f32 0.0, %v1378
        %v1380 = vpop.f32.mrb[0].mxu0
        %v1381 = vadd.f32 0.0, %v1380
        %v1382 = vpop.f32.mrb[0].mxu0
        %v1383 = vadd.f32 0.0, %v1382
        %v1384 = vpop.f32.mrb[0].mxu0
        %v1385 = vadd.f32 0.0, %v1384
        %1386 = vdwg.mxu0
        %1387 = vmatprep.subr.bf16.mxu0 %v1105
        %1388 = vmatpush1.bf16.msra.mxu0 %v1104
        %1389 = vmatprep.subr.bf16.mxu0 %v1110
        %1390 = vmatpush1.bf16.msra.mxu0 %v1109
        %1391 = vmatprep.subr.bf16.mxu0 %v1115
        %1392 = vmatpush1.bf16.msra.mxu0 %v1114
        %1393 = vmatprep.subr.bf16.mxu0 %v1120
        %1394 = vmatpush1.bf16.msra.mxu0 %v1119
        %1395 = vmatprep.subr.bf16.mxu0 %v1125
        %1396 = vmatpush1.bf16.msra.mxu0 %v1124
        %1397 = vmatprep.subr.bf16.mxu0 %v1130
        %1398 = vmatpush1.bf16.msra.mxu0 %v1129
        %1399 = vmatprep.subr.bf16.mxu0 %v1135
        %1400 = vmatpush1.bf16.msra.mxu0 %v1134
        %1401 = vmatprep.subr.bf16.mxu0 %v1140
        %1402 = vmatpush1.bf16.msra.mxu0 %v1139
        %1403 = vmatprep.subr.bf16.mxu0 %v1145
        %1404 = vmatpush1.bf16.msra.mxu0 %v1144
        %1405 = vmatprep.subr.bf16.mxu0 %v1150
        %1406 = vmatpush1.bf16.msra.mxu0 %v1149
        %1407 = vmatprep.subr.bf16.mxu0 %v1155
        %1408 = vmatpush1.bf16.msra.mxu0 %v1154
        %1409 = vmatprep.subr.bf16.mxu0 %v1160
        %1410 = vmatpush1.bf16.msra.mxu0 %v1159
        %1411 = vmatprep.subr.bf16.mxu0 %v1165
        %1412 = vmatpush1.bf16.msra.mxu0 %v1164
        %1413 = vmatprep.subr.bf16.mxu0 %v1170
        %1414 = vmatpush1.bf16.msra.mxu0 %v1169
        %1415 = vmatprep.subr.bf16.mxu0 %v1175
        %1416 = vmatpush1.bf16.msra.mxu0 %v1174
        %1417 = vmatprep.subr.bf16.mxu0 %v1180
        %1418 = vmatpush1.bf16.msra.mxu0 %v1179
        %1419 = vmatprep.mubr.bf16.mxu0 %v318
        %1420 = vmatmul.mubr.bf16.gmra.mrb[0].mxu0 %v307
        %v1421 = vpop.f32.mrb[0].mxu0
        %v1422 = vadd.f32 %v1379, %v1421
        %v1423 = vpop.f32.mrb[0].mxu0
        %v1424 = vadd.f32 %v1381, %v1423
        %v1425 = vpop.f32.mrb[0].mxu0
        %v1426 = vadd.f32 %v1383, %v1425
        %v1427 = vpop.f32.mrb[0].mxu0
        %v1428 = vadd.f32 %v1385, %v1427
        %1429 = vdwg.mxu0
        %1430 = vmatprep.subr.bf16.mxu0 %v1027
        %1431 = vmatpush1.bf16.msra.mxu0 %v1026
        %1432 = vmatprep.subr.bf16.mxu0 %v1032
        %1433 = vmatpush1.bf16.msra.mxu0 %v1031
        %1434 = vmatprep.subr.bf16.mxu0 %v1037
        %1435 = vmatpush1.bf16.msra.mxu0 %v1036
        %1436 = vmatprep.subr.bf16.mxu0 %v1042
        %1437 = vmatpush1.bf16.msra.mxu0 %v1041
        %1438 = vmatprep.subr.bf16.mxu0 %v1047
        %1439 = vmatpush1.bf16.msra.mxu0 %v1046
        %1440 = vmatprep.subr.bf16.mxu0 %v1052
        %1441 = vmatpush1.bf16.msra.mxu0 %v1051
        %1442 = vmatprep.subr.bf16.mxu0 %v1057
        %1443 = vmatpush1.bf16.msra.mxu0 %v1056
        %1444 = vmatprep.subr.bf16.mxu0 %v1062
        %1445 = vmatpush1.bf16.msra.mxu0 %v1061
        %1446 = vmatprep.subr.bf16.mxu0 %v1067
        %1447 = vmatpush1.bf16.msra.mxu0 %v1066
        %1448 = vmatprep.subr.bf16.mxu0 %v1072
        %1449 = vmatpush1.bf16.msra.mxu0 %v1071
        %1450 = vmatprep.subr.bf16.mxu0 %v1077
        %1451 = vmatpush1.bf16.msra.mxu0 %v1076
        %1452 = vmatprep.subr.bf16.mxu0 %v1082
        %1453 = vmatpush1.bf16.msra.mxu0 %v1081
        %1454 = vmatprep.subr.bf16.mxu0 %v1087
        %1455 = vmatpush1.bf16.msra.mxu0 %v1086
        %1456 = vmatprep.subr.bf16.mxu0 %v1092
        %1457 = vmatpush1.bf16.msra.mxu0 %v1091
        %1458 = vmatprep.subr.bf16.mxu0 %v1097
        %1459 = vmatpush1.bf16.msra.mxu0 %v1096
        %1460 = vmatprep.subr.bf16.mxu0 %v1102
        %1461 = vmatpush1.bf16.msra.mxu0 %v1101
        %1462 = vmatprep.mubr.bf16.mxu0 %v300
        %1463 = vmatmul.mubr.bf16.gmra.mrb[0].mxu0 %v286
        %v1464 = vpop.f32.mrb[0].mxu0
        %v1465 = vadd.f32 0.0, %v1464
        %v1466 = vpop.f32.mrb[0].mxu0
        %v1467 = vadd.f32 0.0, %v1466
        %v1468 = vpop.f32.mrb[0].mxu0
        %v1469 = vadd.f32 0.0, %v1468
        %v1470 = vpop.f32.mrb[0].mxu0
        %v1471 = vadd.f32 0.0, %v1470
        %1472 = vdwg.mxu0
        %1473 = vmatprep.subr.bf16.mxu0 %v1107
        %1474 = vmatpush1.bf16.msra.mxu0 %v1106
        %1475 = vmatprep.subr.bf16.mxu0 %v1112
        %1476 = vmatpush1.bf16.msra.mxu0 %v1111
        %1477 = vmatprep.subr.bf16.mxu0 %v1117
        %1478 = vmatpush1.bf16.msra.mxu0 %v1116
        %1479 = vmatprep.subr.bf16.mxu0 %v1122
        %1480 = vmatpush1.bf16.msra.mxu0 %v1121
        %1481 = vmatprep.subr.bf16.mxu0 %v1127
        %1482 = vmatpush1.bf16.msra.mxu0 %v1126
        %1483 = vmatprep.subr.bf16.mxu0 %v1132
        %1484 = vmatpush1.bf16.msra.mxu0 %v1131
        %1485 = vmatprep.subr.bf16.mxu0 %v1137
        %1486 = vmatpush1.bf16.msra.mxu0 %v1136
        %1487 = vmatprep.subr.bf16.mxu0 %v1142
        %1488 = vmatpush1.bf16.msra.mxu0 %v1141
        %1489 = vmatprep.subr.bf16.mxu0 %v1147
        %1490 = vmatpush1.bf16.msra.mxu0 %v1146
        %1491 = vmatprep.subr.bf16.mxu0 %v1152
        %1492 = vmatpush1.bf16.msra.mxu0 %v1151
        %1493 = vmatprep.subr.bf16.mxu0 %v1157
        %1494 = vmatpush1.bf16.msra.mxu0 %v1156
        %1495 = vmatprep.subr.bf16.mxu0 %v1162
        %1496 = vmatpush1.bf16.msra.mxu0 %v1161
        %1497 = vmatprep.subr.bf16.mxu0 %v1167
        %1498 = vmatpush1.bf16.msra.mxu0 %v1166
        %1499 = vmatprep.subr.bf16.mxu0 %v1172
        %1500 = vmatpush1.bf16.msra.mxu0 %v1171
        %1501 = vmatprep.subr.bf16.mxu0 %v1177
        %1502 = vmatpush1.bf16.msra.mxu0 %v1176
        %1503 = vmatprep.subr.bf16.mxu0 %v1182
        %1504 = vmatpush1.bf16.msra.mxu0 %v1181
        %1505 = vmatprep.mubr.bf16.mxu0 %v318
        %1506 = vmatmul.mubr.bf16.gmra.mrb[0].mxu0 %v307
        %v1507 = vpop.f32.mrb[0].mxu0
        %v1508 = vadd.f32 %v1465, %v1507
        %v1509 = vpop.f32.mrb[0].mxu0
        %v1510 = vadd.f32 %v1467, %v1509
        %v1511 = vpop.f32.mrb[0].mxu0
        %v1512 = vadd.f32 %v1469, %v1511
        %v1513 = vpop.f32.mrb[0].mxu0
        %v1514 = vadd.f32 %v1471, %v1513
        %1515 = vdwg.mxu0
        %1516 = vmatprep.subr.bf16.mxu0 0
        %1517 = vmatpush1.bf16.msra.mxu0 %v1028
        %1518 = vmatprep.subr.bf16.mxu0 0
        %1519 = vmatpush1.bf16.msra.mxu0 %v1033
        %1520 = vmatprep.subr.bf16.mxu0 0
        %1521 = vmatpush1.bf16.msra.mxu0 %v1038
        %1522 = vmatprep.subr.bf16.mxu0 0
        %1523 = vmatpush1.bf16.msra.mxu0 %v1043
        %1524 = vmatprep.subr.bf16.mxu0 0
        %1525 = vmatpush1.bf16.msra.mxu0 %v1048
        %1526 = vmatprep.subr.bf16.mxu0 0
        %1527 = vmatpush1.bf16.msra.mxu0 %v1053
        %1528 = vmatprep.subr.bf16.mxu0 0
        %1529 = vmatpush1.bf16.msra.mxu0 %v1058
        %1530 = vmatprep.subr.bf16.mxu0 0
        %1531 = vmatpush1.bf16.msra.mxu0 %v1063
        %1532 = vmatprep.subr.bf16.mxu0 0
        %1533 = vmatpush1.bf16.msra.mxu0 %v1068
        %1534 = vmatprep.subr.bf16.mxu0 0
        %1535 = vmatpush1.bf16.msra.mxu0 %v1073
        %1536 = vmatprep.subr.bf16.mxu0 0
        %1537 = vmatpush1.bf16.msra.mxu0 %v1078
        %1538 = vmatprep.subr.bf16.mxu0 0
        %1539 = vmatpush1.bf16.msra.mxu0 %v1083
        %1540 = vmatprep.subr.bf16.mxu0 0
        %1541 = vmatpush1.bf16.msra.mxu0 %v1088
        %1542 = vmatprep.subr.bf16.mxu0 0
        %1543 = vmatpush1.bf16.msra.mxu0 %v1093
        %1544 = vmatprep.subr.bf16.mxu0 0
        %1545 = vmatpush1.bf16.msra.mxu0 %v1098
        %1546 = vmatprep.subr.bf16.mxu0 0
        %1547 = vmatpush1.bf16.msra.mxu0 %v1103
        %1548 = vmatprep.mubr.bf16.mxu0 %v300
        %1549 = vmatmul.mubr.bf16.gmra.mrb[0].mxu0 %v286
        %v1550 = vpop.f32.mrb[0].mxu0
        %v1551 = vadd.f32 0.0, %v1550
        %v1552 = vpop.f32.mrb[0].mxu0
        %v1553 = vpop.f32.mrb[0].mxu0
        %v1554 = vadd.f32 0.0, %v1553
        %v1555 = vpop.f32.mrb[0].mxu0
        %1556 = vdwg.mxu0
        %1557 = vmatprep.subr.bf16.mxu0 0
        %1558 = vmatpush1.bf16.msra.mxu0 %v1108
        %1559 = vmatprep.subr.bf16.mxu0 0
        %1560 = vmatpush1.bf16.msra.mxu0 %v1113
        %1561 = vmatprep.subr.bf16.mxu0 0
        %1562 = vmatpush1.bf16.msra.mxu0 %v1118
        %1563 = vmatprep.subr.bf16.mxu0 0
        %1564 = vmatpush1.bf16.msra.mxu0 %v1123
        %1565 = vmatprep.subr.bf16.mxu0 0
        %1566 = vmatpush1.bf16.msra.mxu0 %v1128
        %1567 = vmatprep.subr.bf16.mxu0 0
        %1568 = vmatpush1.bf16.msra.mxu0 %v1133
        %1569 = vmatprep.subr.bf16.mxu0 0
        %1570 = vmatpush1.bf16.msra.mxu0 %v1138
        %1571 = vmatprep.subr.bf16.mxu0 0
        %1572 = vmatpush1.bf16.msra.mxu0 %v1143
        %1573 = vmatprep.subr.bf16.mxu0 0
        %1574 = vmatpush1.bf16.msra.mxu0 %v1148
        %1575 = vmatprep.subr.bf16.mxu0 0
        %1576 = vmatpush1.bf16.msra.mxu0 %v1153
        %1577 = vmatprep.subr.bf16.mxu0 0
        %1578 = vmatpush1.bf16.msra.mxu0 %v1158
        %1579 = vmatprep.subr.bf16.mxu0 0
        %1580 = vmatpush1.bf16.msra.mxu0 %v1163
        %1581 = vmatprep.subr.bf16.mxu0 0
        %1582 = vmatpush1.bf16.msra.mxu0 %v1168
        %1583 = vmatprep.subr.bf16.mxu0 0
        %1584 = vmatpush1.bf16.msra.mxu0 %v1173
        %1585 = vmatprep.subr.bf16.mxu0 0
        %1586 = vmatpush1.bf16.msra.mxu0 %v1178
        %1587 = vmatprep.subr.bf16.mxu0 0
        %1588 = vmatpush1.bf16.msra.mxu0 %v1183
        %1589 = vmatprep.mubr.bf16.mxu0 %v318
        %1590 = vmatmul.mubr.bf16.gmra.mrb[0].mxu0 %v307
        %v1591 = vpop.f32.mrb[0].mxu0
        %v1592 = vadd.f32 %v1551, %v1591
        %v1593 = vpop.f32.mrb[0].mxu0
        %v1594 = vpop.f32.mrb[0].mxu0
        %v1595 = vadd.f32 %v1554, %v1594
        %v1596 = vpop.f32.mrb[0].mxu0
        %1597 = vdwg.mxu0
        %1598 = vst [vmem:[%s273] sm:$0xff] %v1422
        %1599 = vst [vmem:[%s273 + $0x8] sm:$0xff] %v1424
        %1600 = vst [vmem:[%s273 + $0x10] sm:$0xff] %v1508
        %1601 = vst [vmem:[%s273 + $0x18] sm:$0xff] %v1510
        %1602 = vst [vmem:[%s273 + $0x20] sm:$0xff] %v1592
        %1603 = vst [vmem:[%s273 + $0x28] sm:$0xff] %v1426
        %1604 = vst [vmem:[%s273 + $0x30] sm:$0xff] %v1428
        %1605 = vst [vmem:[%s273 + $0x38] sm:$0xff] %v1512
        %1606 = vst [vmem:[%s273 + $0x40] sm:$0xff] %v1514
        %1607 = vst [vmem:[%s273 + $0x48] sm:$0xff] %v1595
        %s1608 = sand.u32 %s126, 1
        %s1609 = scalar_lea.sflag [#allocation4], %s1608
        %s1610 = sand.u32 %s126, 1
        %s1611 = smul.addr %s1610, 80
        %s1612 = scalar_lea.vmem [#allocation8], %s1611
        // Predicated region
        $region45: #{tpu_custom_call.1} parent=31 // pred_check
          %p1613 = pneg %p136
        $region46: #{tpu_custom_call.1} parent=31 // pred_check_branch
          %1615 = sbr.rel (%p1613) target = $region48
        $region47: #{tpu_custom_call.1} parent=31 // pred_region
          %s1616 = smul.u32 2, %s28
          %s1618 = ssub.s32 1280, 1280
          %1619 = vsyncadd %s1609, %s1618
          %s1620 = smul.addr %s1616, 5
          %s1621 = smul.addr %s27, 30
          %s1622 = sadd.s32 %s1620, %s1621
          %s1623 = smul.addr %s1622, 128
          %s1624 = scalar_lea.hbm %s3, %s1623
          %s1625 = sshll.u32 %s1612, 4
          %s1626 = int_to_ptr.vmem [resolvable:$true] %s1625
          %1631 = dma.vmem_to_hbm [thread:$0]  %s1626, 1280, %s1624, %s1609, 640, 640, 40
        $region48: #{tpu_custom_call.1} parent=31 // pred_fallthru
          _
      $region32: #{tpu_custom_call.1} parent=5 // pred_fallthru
        _
      %p1632 = scmp.le.s32.totalorder 2, %s18
      // Predicated region
      $region49: #{tpu_custom_call.1} parent=5 // pred_check
        %p1633 = pneg %p1632
      $region50: #{tpu_custom_call.1} parent=5 // pred_check_branch
        %1635 = sbr.rel (%p1633) target = $region52
      $region51: #{tpu_custom_call.1} parent=5 // pred_region
        %s1636 = ssub.s32 %s18, 2
        // Predicated region
        $region53: #{tpu_custom_call.1} parent=51 // pred_check
          %p1637 = pneg %p142
        $region54: #{tpu_custom_call.1} parent=51 // pred_check_branch
          %1639 = sbr.rel (%p1637) target = $region56
        $region55: #{tpu_custom_call.1} parent=51 // pred_region
          %s1640 = sand.u32 %s127, 1
          %s1641 = scalar_lea.sflag [#allocation4], %s1640
          %s1642 = sand.u32 %s127, 1
          %s1643 = smul.addr %s1642, 80
          %s1644 = scalar_lea.vmem [#allocation8], %s1643
          %1645 = dma.done %s1641, 1280
        $region56: #{tpu_custom_call.1} parent=51 // pred_fallthru
          _
      $region52: #{tpu_custom_call.1} parent=5 // pred_fallthru
        _
    $region6: #{tpu_custom_call.1} parent=1 // loop_footer
      %s22 = sadd.s32 1, %s18
    $region7: #{tpu_custom_call.1} parent=1 // loop_footer_branch
      %17 = sbr.rel target = $region3
    $region8: #{tpu_custom_call.1} parent=1 // loop_exit
      _
    %1646 = vsyncpa [#allocation3], 1
    %s1647 = scalar_lea.sflag [#allocation3], 1
    %1648 = vsyncpa %s1647, 1
    %1649 = vsyncpa [#allocation6], 1
    %s1650 = scalar_lea.sflag [#allocation6], 1
    %1651 = vsyncpa %s1650, 1
    %1652 = vsyncpa [#allocation4], 1
    %s1653 = scalar_lea.sflag [#allocation4], 1
    %1654 = vsyncpa %s1653, 1

</llo_original>
